<compile_context>
chip_gen: v7x
topology: tpu7x:2x2x1
jax: 0.10.0
libtpu: 0.0.40
codegen_flags: <defaults>
</compile_context>

<pallas_src>
import math

import numpy as np

import jax
import jax.numpy as jnp
from jax.experimental import pallas as pl
from jax.experimental.pallas import tpu as pltpu

BN_EPS = 1e-5
NUM_CLASSES = 10

# (cin, cout, kernel, stride, pad) for the four conv blocks (mirrors __init__).
LAYER_SPECS = [
    (2, 8, 5, 2, 2),
    (8, 16, 3, 2, 1),
    (16, 32, 3, 2, 1),
    (32, 64, 3, 2, 1),
]


# ---------------------------------------------------------------------------
# Fused Pallas kernel: 4x (conv-as-matmul + bias + ReLU + BatchNorm) + head.
# ---------------------------------------------------------------------------
def fused_audio_classifier_kernel(x_ref, wb1, aux1, wb2, aux2, wb3, aux3, wb4,
                                  aux4, head_ref, o_ref):
    """All refs are whole arrays resident in VMEM.

    x_ref:    (N, C_in*H*W)          flattened NCHW input
    wb_l:     (In_l + 1, Out_l)      rows [Toeplitz conv matrix ; tiled bias]
    aux_l:    (Cout_l + 2, Out_l)    rows [channel one-hot pattern ; tiled gamma ; tiled beta]
    head_ref: (S4*C4 + 1, 10)        rows [pool-folded Linear weight ; bias]
    o_ref:    (N, 10)
    Layer activations are kept as (N, OH*OW*Cout) values, lanes ordered
    spatial-major / channel-minor, and never leave the kernel.
    """

    def conv_relu_bn(act, wb_ref, aux_ref):
        in_rows = wb_ref.shape[0] - 1        # flattened input features
        out_cols = wb_ref.shape[1]           # OH*OW*Cout
        cout = aux_ref.shape[0] - 2

        w = wb_ref[0:in_rows, :]             # (In, Out)
        b = wb_ref[in_rows:in_rows + 1, :]   # (1, Out)  bias tiled over spatial
        pt = aux_ref[0:cout, :]              # (Cout, Out)  pt[c, o] = 1 iff lane o is channel c
        gamma = aux_ref[cout:cout + 1, :]    # (1, Out)  tiled
        beta = aux_ref[cout + 1:cout + 2, :]

        # Conv (dense unrolled matmul) + bias + ReLU (ReLU precedes BN in the module).
        y = jnp.dot(act, w, preferred_element_type=jnp.float32) + b
        y = jnp.maximum(y, 0.0)

        # BatchNorm2d, training-mode biased batch stats, single pass over y.
        n_rows = y.shape[0]
        spatial = out_cols // cout
        cnt = float(n_rows * spatial)
        colsum = jnp.sum(y, axis=0, keepdims=True)            # (1, Out)
        colsq = jnp.sum(y * y, axis=0, keepdims=True)         # (1, Out)
        ch_sum = jnp.sum(pt * colsum, axis=1, keepdims=True)  # (Cout, 1)
        ch_sq = jnp.sum(pt * colsq, axis=1, keepdims=True)    # (Cout, 1)
        mean_c = ch_sum / cnt
        var_c = jnp.maximum(ch_sq / cnt - mean_c * mean_c, 0.0)
        # Broadcast per-channel stats back to the (spatial, channel) lane layout.
        mean_row = jnp.sum(pt * mean_c, axis=0, keepdims=True)  # (1, Out)
        var_row = jnp.sum(pt * var_c, axis=0, keepdims=True)    # (1, Out)
        inv = jax.lax.rsqrt(var_row + BN_EPS)
        return (y - mean_row) * (gamma * inv) + beta

    act = x_ref[...]
    act = conv_relu_bn(act, wb1, aux1)
    act = conv_relu_bn(act, wb2, aux2)
    act = conv_relu_bn(act, wb3, aux3)
    act = conv_relu_bn(act, wb4, aux4)

    # Head: adaptive average pool is already folded into the Linear weight.
    nf = head_ref.shape[0] - 1
    w_head = head_ref[0:nf, :]
    b_head = head_ref[nf:nf + 1, :]
    o_ref[...] = jnp.dot(act, w_head, preferred_element_type=jnp.float32) + b_head


# ---------------------------------------------------------------------------
# Build-time weight transforms (plain numpy on concrete initial parameters).
# ---------------------------------------------------------------------------
def _toeplitz_conv_matrix(w_khwc, h, w, cin, cout, k, s, p, nchw_rows):
    """Dense matrix M so that flat_out = flat_in @ M equals the padded strided conv.

    Columns are ordered (oh, ow, cout) spatial-major / channel-minor.
    Rows follow the flattened input layout: NCHW order for the network input
    (nchw_rows=True), otherwise the (spatial, channel) order produced by the
    previous layer inside the kernel.
    """
    oh = (h + 2 * p - k) // s + 1
    ow = (w + 2 * p - k) // s + 1
    mat = np.zeros((h * w * cin, oh * ow * cout), np.float32)
    wk = np.asarray(w_khwc, np.float32)  # (k, k, cin, cout)
    for oy in range(oh):
        for ox in range(ow):
            col0 = (oy * ow + ox) * cout
            for kh in range(k):
                iy = oy * s + kh - p
                if iy < 0 or iy >= h:
                    continue  # zero padding row -> contributes nothing
                for kw in range(k):
                    ix = ox * s + kw - p
                    if ix < 0 or ix >= w:
                        continue  # zero padding col
                    if nchw_rows:
                        for ci in range(cin):
                            mat[ci * h * w + iy * w + ix,
                                col0:col0 + cout] = wk[kh, kw, ci]
                    else:
                        r0 = (iy * w + ix) * cin
                        mat[r0:r0 + cin, col0:col0 + cout] = wk[kh, kw]
    return mat, oh, ow


def build_params(key, h=16, w=16):
    """PyTorch-style init (kaiming_normal_ a=0.1, zero conv bias, BN gamma=1/beta=0,
    uniform Linear init), folded into the packed operands the fused kernel consumes."""
    wbs, auxs = [], []
    cur_h, cur_w = h, w
    for idx, (cin, cout, k, s, p) in enumerate(LAYER_SPECS):
        key, wkey = jax.random.split(key)
        fan_in = cin * k * k
        gain = math.sqrt(2.0 / (1.0 + 0.1 ** 2))  # kaiming_normal_, a=0.1
        std = gain / math.sqrt(fan_in)
        w_khwc = jax.random.normal(wkey, (k, k, cin, cout), jnp.float32) * std
        bias = np.zeros((cout,), np.float32)   # conv bias zeroed in __init__
        gamma = np.ones((cout,), np.float32)   # BatchNorm2d defaults
        beta = np.zeros((cout,), np.float32)

        mat, oh, ow = _toeplitz_conv_matrix(
            w_khwc, cur_h, cur_w, cin, cout, k, s, p, nchw_rows=(idx == 0))
        out_cols = oh * ow * cout
        spatial = oh * ow

        wb = np.concatenate([mat, np.tile(bias, spatial)[None, :]], axis=0)
        pt = (np.arange(out_cols)[None, :] % cout ==
              np.arange(cout)[:, None]).astype(np.float32)
        aux = np.concatenate(
            [pt, np.tile(gamma, spatial)[None, :], np.tile(beta, spatial)[None, :]],
            axis=0)

        wbs.append(jnp.asarray(wb))
        auxs.append(jnp.asarray(aux))
        cur_h, cur_w = oh, ow

    # Head: AdaptiveAvgPool2d(1) folded into the Linear weight (pool is linear).
    c_last = LAYER_SPECS[-1][1]
    spatial_last = cur_h * cur_w
    key, lwkey, lbkey = jax.random.split(key, 3)
    bound = 1.0 / math.sqrt(c_last)
    lin_w = jax.random.uniform(lwkey, (c_last, NUM_CLASSES), jnp.float32, -bound, bound)
    lin_b = jax.random.uniform(lbkey, (1, NUM_CLASSES), jnp.float32, -bound, bound)
    lin_w_eff = jnp.tile(lin_w, (spatial_last, 1)) / float(spatial_last)
    head = jnp.concatenate([lin_w_eff, lin_b], axis=0)  # (spatial*C + 1, 10)
    return wbs, auxs, head


# ---------------------------------------------------------------------------
# Forward pass: single pallas_call, whole arrays in VMEM (no grid needed).
# ---------------------------------------------------------------------------
_VMEM = pl.BlockSpec(memory_space=pltpu.MemorySpace.VMEM)


def audio_classifier_forward(x_nchw, wbs, auxs, head):
    n = x_nchw.shape[0]
    x_flat = x_nchw.reshape(n, -1).astype(jnp.float32)  # NCHW flatten (matches layer-1 matrix rows)
    args = [x_flat]
    for wb, aux in zip(wbs, auxs):
        args.extend([wb, aux])
    args.append(head)
    return pl.pallas_call(
        fused_audio_classifier_kernel,
        out_shape=jax.ShapeDtypeStruct((n, NUM_CLASSES), jnp.float32),
        in_specs=[_VMEM] * len(args),
        out_specs=_VMEM,
    )(*args)


if __name__ == "__main__":
    key = jax.random.PRNGKey(0)
    key, pkey, xkey = jax.random.split(key, 3)
    wbs, auxs, head = build_params(pkey, h=16, w=16)

    # Small stereo-spectrogram-like input: (N=2, C=2, H=16, W=16), NCHW.
    x = jax.random.normal(xkey, (2, 2, 16, 16), jnp.float32)

    logits = audio_classifier_forward(x, wbs, auxs, head)
    jax.block_until_ready(logits)
    assert logits.shape == (2, NUM_CLASSES)
    print("KERNEL_OK")
</pallas_src>

<mosaic_0001>
module attributes {stable_mosaic.version = 11 : i64} {
  func.func @fused_audio_classifier_kernel(%arg0: memref<2x512xf32, #tpu.memory_space<vmem>>, %arg1: memref<513x512xf32, #tpu.memory_space<vmem>>, %arg2: memref<10x512xf32, #tpu.memory_space<vmem>>, %arg3: memref<513x256xf32, #tpu.memory_space<vmem>>, %arg4: memref<18x256xf32, #tpu.memory_space<vmem>>, %arg5: memref<257x128xf32, #tpu.memory_space<vmem>>, %arg6: memref<34x128xf32, #tpu.memory_space<vmem>>, %arg7: memref<129x64xf32, #tpu.memory_space<vmem>>, %arg8: memref<66x64xf32, #tpu.memory_space<vmem>>, %arg9: memref<65x10xf32, #tpu.memory_space<vmem>>, %arg10: memref<2x10xf32, #tpu.memory_space<vmem>>) attributes {dimension_semantics = [], scalar_prefetch = 0 : i64, scratch_operands = 0 : i64, tpu.core_type = #tpu.core_type<tc>} {
    %c0 = arith.constant 0 : index
    %c0_0 = arith.constant 0 : index
    %0 = vector.load %arg0[%c0, %c0_0] : memref<2x512xf32, #tpu.memory_space<vmem>>, vector<2x512xf32>
    %c0_1 = arith.constant 0 : index
    %c0_2 = arith.constant 0 : index
    %1 = vector.load %arg1[%c0_1, %c0_2] : memref<513x512xf32, #tpu.memory_space<vmem>>, vector<512x512xf32>
    %c512 = arith.constant 512 : index
    %c0_3 = arith.constant 0 : index
    %2 = vector.load %arg1[%c512, %c0_3] : memref<513x512xf32, #tpu.memory_space<vmem>>, vector<1x512xf32>
    %c0_4 = arith.constant 0 : index
    %c0_5 = arith.constant 0 : index
    %3 = vector.load %arg2[%c0_4, %c0_5] : memref<10x512xf32, #tpu.memory_space<vmem>>, vector<8x512xf32>
    %c8 = arith.constant 8 : index
    %c0_6 = arith.constant 0 : index
    %4 = vector.load %arg2[%c8, %c0_6] : memref<10x512xf32, #tpu.memory_space<vmem>>, vector<1x512xf32>
    %c9 = arith.constant 9 : index
    %c0_7 = arith.constant 0 : index
    %5 = vector.load %arg2[%c9, %c0_7] : memref<10x512xf32, #tpu.memory_space<vmem>>, vector<1x512xf32>
    %cst = arith.constant dense<0.000000e+00> : vector<2x512xf32>
    %6 = tpu.matmul %0, %1, %cst {dimension_numbers = #tpu.dot_dimension_numbers<[1], [0], [0], [1], [0, 0, 1, 1], [], []>} : vector<2x512xf32>, vector<512x512xf32>, vector<2x512xf32> -> vector<2x512xf32>
    %7 = vector.broadcast %2 : vector<1x512xf32> to vector<2x512xf32>
    %8 = arith.addf %6, %7 : vector<2x512xf32>
    %cst_8 = arith.constant 0.000000e+00 : f32
    %9 = vector.broadcast %cst_8 : f32 to vector<2x512xf32>
    %10 = arith.maximumf %8, %9 : vector<2x512xf32>
    %cst_9 = arith.constant dense<0.000000e+00> : vector<512xf32>
    %11 = vector.multi_reduction <add>, %10, %cst_9 [0] : vector<2x512xf32> to vector<512xf32>
    %12 = vector.shape_cast %11 : vector<512xf32> to vector<1x512xf32>
    %13 = arith.mulf %10, %10 : vector<2x512xf32>
    %cst_10 = arith.constant dense<0.000000e+00> : vector<512xf32>
    %14 = vector.multi_reduction <add>, %13, %cst_10 [0] : vector<2x512xf32> to vector<512xf32>
    %15 = vector.shape_cast %14 : vector<512xf32> to vector<1x512xf32>
    %16 = vector.broadcast %12 : vector<1x512xf32> to vector<8x512xf32>
    %17 = arith.mulf %3, %16 : vector<8x512xf32>
    %cst_11 = arith.constant dense<0.000000e+00> : vector<8xf32>
    %18 = vector.multi_reduction <add>, %17, %cst_11 [1] : vector<8x512xf32> to vector<8xf32>
    %19 = vector.shape_cast %18 : vector<8xf32> to vector<8x1xf32>
    %20 = vector.broadcast %15 : vector<1x512xf32> to vector<8x512xf32>
    %21 = arith.mulf %3, %20 : vector<8x512xf32>
    %cst_12 = arith.constant dense<0.000000e+00> : vector<8xf32>
    %22 = vector.multi_reduction <add>, %21, %cst_12 [1] : vector<8x512xf32> to vector<8xf32>
    %23 = vector.shape_cast %22 : vector<8xf32> to vector<8x1xf32>
    %cst_13 = arith.constant 1.280000e+02 : f32
    %24 = vector.broadcast %cst_13 : f32 to vector<8x1xf32>
    %25 = arith.divf %19, %24 : vector<8x1xf32>
    %cst_14 = arith.constant 1.280000e+02 : f32
    %26 = vector.broadcast %cst_14 : f32 to vector<8x1xf32>
    %27 = arith.divf %23, %26 : vector<8x1xf32>
    %28 = arith.mulf %25, %25 : vector<8x1xf32>
    %29 = arith.subf %27, %28 : vector<8x1xf32>
    %cst_15 = arith.constant 0.000000e+00 : f32
    %30 = vector.broadcast %cst_15 : f32 to vector<8x1xf32>
    %31 = arith.maximumf %29, %30 : vector<8x1xf32>
    %32 = vector.broadcast %25 : vector<8x1xf32> to vector<8x512xf32>
    %33 = arith.mulf %3, %32 : vector<8x512xf32>
    %cst_16 = arith.constant dense<0.000000e+00> : vector<512xf32>
    %34 = vector.multi_reduction <add>, %33, %cst_16 [0] : vector<8x512xf32> to vector<512xf32>
    %35 = vector.shape_cast %34 : vector<512xf32> to vector<1x512xf32>
    %36 = vector.broadcast %31 : vector<8x1xf32> to vector<8x512xf32>
    %37 = arith.mulf %3, %36 : vector<8x512xf32>
    %cst_17 = arith.constant dense<0.000000e+00> : vector<512xf32>
    %38 = vector.multi_reduction <add>, %37, %cst_17 [0] : vector<8x512xf32> to vector<512xf32>
    %39 = vector.shape_cast %38 : vector<512xf32> to vector<1x512xf32>
    %cst_18 = arith.constant 9.99999974E-6 : f32
    %40 = vector.broadcast %cst_18 : f32 to vector<1x512xf32>
    %41 = arith.addf %39, %40 : vector<1x512xf32>
    %42 = math.rsqrt %41 : vector<1x512xf32>
    %43 = vector.broadcast %35 : vector<1x512xf32> to vector<2x512xf32>
    %44 = arith.subf %10, %43 : vector<2x512xf32>
    %45 = arith.mulf %4, %42 : vector<1x512xf32>
    %46 = vector.broadcast %45 : vector<1x512xf32> to vector<2x512xf32>
    %47 = arith.mulf %44, %46 : vector<2x512xf32>
    %48 = vector.broadcast %5 : vector<1x512xf32> to vector<2x512xf32>
    %49 = arith.addf %47, %48 : vector<2x512xf32>
    %c0_19 = arith.constant 0 : index
    %c0_20 = arith.constant 0 : index
    %50 = vector.load %arg3[%c0_19, %c0_20] : memref<513x256xf32, #tpu.memory_space<vmem>>, vector<512x256xf32>
    %c512_21 = arith.constant 512 : index
    %c0_22 = arith.constant 0 : index
    %51 = vector.load %arg3[%c512_21, %c0_22] : memref<513x256xf32, #tpu.memory_space<vmem>>, vector<1x256xf32>
    %c0_23 = arith.constant 0 : index
    %c0_24 = arith.constant 0 : index
    %52 = vector.load %arg4[%c0_23, %c0_24] : memref<18x256xf32, #tpu.memory_space<vmem>>, vector<16x256xf32>
    %c16 = arith.constant 16 : index
    %c0_25 = arith.constant 0 : index
    %53 = vector.load %arg4[%c16, %c0_25] : memref<18x256xf32, #tpu.memory_space<vmem>>, vector<1x256xf32>
    %c17 = arith.constant 17 : index
    %c0_26 = arith.constant 0 : index
    %54 = vector.load %arg4[%c17, %c0_26] : memref<18x256xf32, #tpu.memory_space<vmem>>, vector<1x256xf32>
    %cst_27 = arith.constant dense<0.000000e+00> : vector<2x256xf32>
    %55 = tpu.matmul %49, %50, %cst_27 {dimension_numbers = #tpu.dot_dimension_numbers<[1], [0], [0], [1], [0, 0, 1, 1], [], []>} : vector<2x512xf32>, vector<512x256xf32>, vector<2x256xf32> -> vector<2x256xf32>
    %56 = vector.broadcast %51 : vector<1x256xf32> to vector<2x256xf32>
    %57 = arith.addf %55, %56 : vector<2x256xf32>
    %cst_28 = arith.constant 0.000000e+00 : f32
    %58 = vector.broadcast %cst_28 : f32 to vector<2x256xf32>
    %59 = arith.maximumf %57, %58 : vector<2x256xf32>
    %cst_29 = arith.constant dense<0.000000e+00> : vector<256xf32>
    %60 = vector.multi_reduction <add>, %59, %cst_29 [0] : vector<2x256xf32> to vector<256xf32>
    %61 = vector.shape_cast %60 : vector<256xf32> to vector<1x256xf32>
    %62 = arith.mulf %59, %59 : vector<2x256xf32>
    %cst_30 = arith.constant dense<0.000000e+00> : vector<256xf32>
    %63 = vector.multi_reduction <add>, %62, %cst_30 [0] : vector<2x256xf32> to vector<256xf32>
    %64 = vector.shape_cast %63 : vector<256xf32> to vector<1x256xf32>
    %65 = vector.broadcast %61 : vector<1x256xf32> to vector<16x256xf32>
    %66 = arith.mulf %52, %65 : vector<16x256xf32>
    %cst_31 = arith.constant dense<0.000000e+00> : vector<16xf32>
    %67 = vector.multi_reduction <add>, %66, %cst_31 [1] : vector<16x256xf32> to vector<16xf32>
    %68 = vector.shape_cast %67 : vector<16xf32> to vector<16x1xf32>
    %69 = vector.broadcast %64 : vector<1x256xf32> to vector<16x256xf32>
    %70 = arith.mulf %52, %69 : vector<16x256xf32>
    %cst_32 = arith.constant dense<0.000000e+00> : vector<16xf32>
    %71 = vector.multi_reduction <add>, %70, %cst_32 [1] : vector<16x256xf32> to vector<16xf32>
    %72 = vector.shape_cast %71 : vector<16xf32> to vector<16x1xf32>
    %cst_33 = arith.constant 3.200000e+01 : f32
    %73 = vector.broadcast %cst_33 : f32 to vector<16x1xf32>
    %74 = arith.divf %68, %73 : vector<16x1xf32>
    %cst_34 = arith.constant 3.200000e+01 : f32
    %75 = vector.broadcast %cst_34 : f32 to vector<16x1xf32>
    %76 = arith.divf %72, %75 : vector<16x1xf32>
    %77 = arith.mulf %74, %74 : vector<16x1xf32>
    %78 = arith.subf %76, %77 : vector<16x1xf32>
    %cst_35 = arith.constant 0.000000e+00 : f32
    %79 = vector.broadcast %cst_35 : f32 to vector<16x1xf32>
    %80 = arith.maximumf %78, %79 : vector<16x1xf32>
    %81 = vector.broadcast %74 : vector<16x1xf32> to vector<16x256xf32>
    %82 = arith.mulf %52, %81 : vector<16x256xf32>
    %cst_36 = arith.constant dense<0.000000e+00> : vector<256xf32>
    %83 = vector.multi_reduction <add>, %82, %cst_36 [0] : vector<16x256xf32> to vector<256xf32>
    %84 = vector.shape_cast %83 : vector<256xf32> to vector<1x256xf32>
    %85 = vector.broadcast %80 : vector<16x1xf32> to vector<16x256xf32>
    %86 = arith.mulf %52, %85 : vector<16x256xf32>
    %cst_37 = arith.constant dense<0.000000e+00> : vector<256xf32>
    %87 = vector.multi_reduction <add>, %86, %cst_37 [0] : vector<16x256xf32> to vector<256xf32>
    %88 = vector.shape_cast %87 : vector<256xf32> to vector<1x256xf32>
    %cst_38 = arith.constant 9.99999974E-6 : f32
    %89 = vector.broadcast %cst_38 : f32 to vector<1x256xf32>
    %90 = arith.addf %88, %89 : vector<1x256xf32>
    %91 = math.rsqrt %90 : vector<1x256xf32>
    %92 = vector.broadcast %84 : vector<1x256xf32> to vector<2x256xf32>
    %93 = arith.subf %59, %92 : vector<2x256xf32>
    %94 = arith.mulf %53, %91 : vector<1x256xf32>
    %95 = vector.broadcast %94 : vector<1x256xf32> to vector<2x256xf32>
    %96 = arith.mulf %93, %95 : vector<2x256xf32>
    %97 = vector.broadcast %54 : vector<1x256xf32> to vector<2x256xf32>
    %98 = arith.addf %96, %97 : vector<2x256xf32>
    %c0_39 = arith.constant 0 : index
    %c0_40 = arith.constant 0 : index
    %99 = vector.load %arg5[%c0_39, %c0_40] : memref<257x128xf32, #tpu.memory_space<vmem>>, vector<256x128xf32>
    %c256 = arith.constant 256 : index
    %c0_41 = arith.constant 0 : index
    %100 = vector.load %arg5[%c256, %c0_41] : memref<257x128xf32, #tpu.memory_space<vmem>>, vector<1x128xf32>
    %c0_42 = arith.constant 0 : index
    %c0_43 = arith.constant 0 : index
    %101 = vector.load %arg6[%c0_42, %c0_43] : memref<34x128xf32, #tpu.memory_space<vmem>>, vector<32x128xf32>
    %c32 = arith.constant 32 : index
    %c0_44 = arith.constant 0 : index
    %102 = vector.load %arg6[%c32, %c0_44] : memref<34x128xf32, #tpu.memory_space<vmem>>, vector<1x128xf32>
    %c33 = arith.constant 33 : index
    %c0_45 = arith.constant 0 : index
    %103 = vector.load %arg6[%c33, %c0_45] : memref<34x128xf32, #tpu.memory_space<vmem>>, vector<1x128xf32>
    %cst_46 = arith.constant dense<0.000000e+00> : vector<2x128xf32>
    %104 = tpu.matmul %98, %99, %cst_46 {dimension_numbers = #tpu.dot_dimension_numbers<[1], [0], [0], [1], [0, 0, 1, 1], [], []>} : vector<2x256xf32>, vector<256x128xf32>, vector<2x128xf32> -> vector<2x128xf32>
    %105 = vector.broadcast %100 : vector<1x128xf32> to vector<2x128xf32>
    %106 = arith.addf %104, %105 : vector<2x128xf32>
    %cst_47 = arith.constant 0.000000e+00 : f32
    %107 = vector.broadcast %cst_47 : f32 to vector<2x128xf32>
    %108 = arith.maximumf %106, %107 : vector<2x128xf32>
    %cst_48 = arith.constant dense<0.000000e+00> : vector<128xf32>
    %109 = vector.multi_reduction <add>, %108, %cst_48 [0] : vector<2x128xf32> to vector<128xf32>
    %110 = vector.shape_cast %109 : vector<128xf32> to vector<1x128xf32>
    %111 = arith.mulf %108, %108 : vector<2x128xf32>
    %cst_49 = arith.constant dense<0.000000e+00> : vector<128xf32>
    %112 = vector.multi_reduction <add>, %111, %cst_49 [0] : vector<2x128xf32> to vector<128xf32>
    %113 = vector.shape_cast %112 : vector<128xf32> to vector<1x128xf32>
    %114 = vector.broadcast %110 : vector<1x128xf32> to vector<32x128xf32>
    %115 = arith.mulf %101, %114 : vector<32x128xf32>
    %cst_50 = arith.constant dense<0.000000e+00> : vector<32xf32>
    %116 = vector.multi_reduction <add>, %115, %cst_50 [1] : vector<32x128xf32> to vector<32xf32>
    %117 = vector.shape_cast %116 : vector<32xf32> to vector<32x1xf32>
    %118 = vector.broadcast %113 : vector<1x128xf32> to vector<32x128xf32>
    %119 = arith.mulf %101, %118 : vector<32x128xf32>
    %cst_51 = arith.constant dense<0.000000e+00> : vector<32xf32>
    %120 = vector.multi_reduction <add>, %119, %cst_51 [1] : vector<32x128xf32> to vector<32xf32>
    %121 = vector.shape_cast %120 : vector<32xf32> to vector<32x1xf32>
    %cst_52 = arith.constant 8.000000e+00 : f32
    %122 = vector.broadcast %cst_52 : f32 to vector<32x1xf32>
    %123 = arith.divf %117, %122 : vector<32x1xf32>
    %cst_53 = arith.constant 8.000000e+00 : f32
    %124 = vector.broadcast %cst_53 : f32 to vector<32x1xf32>
    %125 = arith.divf %121, %124 : vector<32x1xf32>
    %126 = arith.mulf %123, %123 : vector<32x1xf32>
    %127 = arith.subf %125, %126 : vector<32x1xf32>
    %cst_54 = arith.constant 0.000000e+00 : f32
    %128 = vector.broadcast %cst_54 : f32 to vector<32x1xf32>
    %129 = arith.maximumf %127, %128 : vector<32x1xf32>
    %130 = vector.broadcast %123 : vector<32x1xf32> to vector<32x128xf32>
    %131 = arith.mulf %101, %130 : vector<32x128xf32>
    %cst_55 = arith.constant dense<0.000000e+00> : vector<128xf32>
    %132 = vector.multi_reduction <add>, %131, %cst_55 [0] : vector<32x128xf32> to vector<128xf32>
    %133 = vector.shape_cast %132 : vector<128xf32> to vector<1x128xf32>
    %134 = vector.broadcast %129 : vector<32x1xf32> to vector<32x128xf32>
    %135 = arith.mulf %101, %134 : vector<32x128xf32>
    %cst_56 = arith.constant dense<0.000000e+00> : vector<128xf32>
    %136 = vector.multi_reduction <add>, %135, %cst_56 [0] : vector<32x128xf32> to vector<128xf32>
    %137 = vector.shape_cast %136 : vector<128xf32> to vector<1x128xf32>
    %cst_57 = arith.constant 9.99999974E-6 : f32
    %138 = vector.broadcast %cst_57 : f32 to vector<1x128xf32>
    %139 = arith.addf %137, %138 : vector<1x128xf32>
    %140 = math.rsqrt %139 : vector<1x128xf32>
    %141 = vector.broadcast %133 : vector<1x128xf32> to vector<2x128xf32>
    %142 = arith.subf %108, %141 : vector<2x128xf32>
    %143 = arith.mulf %102, %140 : vector<1x128xf32>
    %144 = vector.broadcast %143 : vector<1x128xf32> to vector<2x128xf32>
    %145 = arith.mulf %142, %144 : vector<2x128xf32>
    %146 = vector.broadcast %103 : vector<1x128xf32> to vector<2x128xf32>
    %147 = arith.addf %145, %146 : vector<2x128xf32>
    %c0_58 = arith.constant 0 : index
    %c0_59 = arith.constant 0 : index
    %148 = vector.load %arg7[%c0_58, %c0_59] : memref<129x64xf32, #tpu.memory_space<vmem>>, vector<128x64xf32>
    %c128 = arith.constant 128 : index
    %c0_60 = arith.constant 0 : index
    %149 = vector.load %arg7[%c128, %c0_60] : memref<129x64xf32, #tpu.memory_space<vmem>>, vector<1x64xf32>
    %c0_61 = arith.constant 0 : index
    %c0_62 = arith.constant 0 : index
    %150 = vector.load %arg8[%c0_61, %c0_62] : memref<66x64xf32, #tpu.memory_space<vmem>>, vector<64x64xf32>
    %c64 = arith.constant 64 : index
    %c0_63 = arith.constant 0 : index
    %151 = vector.load %arg8[%c64, %c0_63] : memref<66x64xf32, #tpu.memory_space<vmem>>, vector<1x64xf32>
    %c65 = arith.constant 65 : index
    %c0_64 = arith.constant 0 : index
    %152 = vector.load %arg8[%c65, %c0_64] : memref<66x64xf32, #tpu.memory_space<vmem>>, vector<1x64xf32>
    %cst_65 = arith.constant dense<0.000000e+00> : vector<2x64xf32>
    %153 = tpu.matmul %147, %148, %cst_65 {dimension_numbers = #tpu.dot_dimension_numbers<[1], [0], [0], [1], [0, 0, 1, 1], [], []>} : vector<2x128xf32>, vector<128x64xf32>, vector<2x64xf32> -> vector<2x64xf32>
    %154 = vector.broadcast %149 : vector<1x64xf32> to vector<2x64xf32>
    %155 = arith.addf %153, %154 : vector<2x64xf32>
    %cst_66 = arith.constant 0.000000e+00 : f32
    %156 = vector.broadcast %cst_66 : f32 to vector<2x64xf32>
    %157 = arith.maximumf %155, %156 : vector<2x64xf32>
    %cst_67 = arith.constant dense<0.000000e+00> : vector<64xf32>
    %158 = vector.multi_reduction <add>, %157, %cst_67 [0] : vector<2x64xf32> to vector<64xf32>
    %159 = vector.shape_cast %158 : vector<64xf32> to vector<1x64xf32>
    %160 = arith.mulf %157, %157 : vector<2x64xf32>
    %cst_68 = arith.constant dense<0.000000e+00> : vector<64xf32>
    %161 = vector.multi_reduction <add>, %160, %cst_68 [0] : vector<2x64xf32> to vector<64xf32>
    %162 = vector.shape_cast %161 : vector<64xf32> to vector<1x64xf32>
    %163 = vector.broadcast %159 : vector<1x64xf32> to vector<64x64xf32>
    %164 = arith.mulf %150, %163 : vector<64x64xf32>
    %cst_69 = arith.constant dense<0.000000e+00> : vector<64xf32>
    %165 = vector.multi_reduction <add>, %164, %cst_69 [1] : vector<64x64xf32> to vector<64xf32>
    %166 = vector.shape_cast %165 : vector<64xf32> to vector<64x1xf32>
    %167 = vector.broadcast %162 : vector<1x64xf32> to vector<64x64xf32>
    %168 = arith.mulf %150, %167 : vector<64x64xf32>
    %cst_70 = arith.constant dense<0.000000e+00> : vector<64xf32>
    %169 = vector.multi_reduction <add>, %168, %cst_70 [1] : vector<64x64xf32> to vector<64xf32>
    %170 = vector.shape_cast %169 : vector<64xf32> to vector<64x1xf32>
    %cst_71 = arith.constant 2.000000e+00 : f32
    %171 = vector.broadcast %cst_71 : f32 to vector<64x1xf32>
    %172 = arith.divf %166, %171 : vector<64x1xf32>
    %cst_72 = arith.constant 2.000000e+00 : f32
    %173 = vector.broadcast %cst_72 : f32 to vector<64x1xf32>
    %174 = arith.divf %170, %173 : vector<64x1xf32>
    %175 = arith.mulf %172, %172 : vector<64x1xf32>
    %176 = arith.subf %174, %175 : vector<64x1xf32>
    %cst_73 = arith.constant 0.000000e+00 : f32
    %177 = vector.broadcast %cst_73 : f32 to vector<64x1xf32>
    %178 = arith.maximumf %176, %177 : vector<64x1xf32>
    %179 = vector.broadcast %172 : vector<64x1xf32> to vector<64x64xf32>
    %180 = arith.mulf %150, %179 : vector<64x64xf32>
    %cst_74 = arith.constant dense<0.000000e+00> : vector<64xf32>
    %181 = vector.multi_reduction <add>, %180, %cst_74 [0] : vector<64x64xf32> to vector<64xf32>
    %182 = vector.shape_cast %181 : vector<64xf32> to vector<1x64xf32>
    %183 = vector.broadcast %178 : vector<64x1xf32> to vector<64x64xf32>
    %184 = arith.mulf %150, %183 : vector<64x64xf32>
    %cst_75 = arith.constant dense<0.000000e+00> : vector<64xf32>
    %185 = vector.multi_reduction <add>, %184, %cst_75 [0] : vector<64x64xf32> to vector<64xf32>
    %186 = vector.shape_cast %185 : vector<64xf32> to vector<1x64xf32>
    %cst_76 = arith.constant 9.99999974E-6 : f32
    %187 = vector.broadcast %cst_76 : f32 to vector<1x64xf32>
    %188 = arith.addf %186, %187 : vector<1x64xf32>
    %189 = math.rsqrt %188 : vector<1x64xf32>
    %190 = vector.broadcast %182 : vector<1x64xf32> to vector<2x64xf32>
    %191 = arith.subf %157, %190 : vector<2x64xf32>
    %192 = arith.mulf %151, %189 : vector<1x64xf32>
    %193 = vector.broadcast %192 : vector<1x64xf32> to vector<2x64xf32>
    %194 = arith.mulf %191, %193 : vector<2x64xf32>
    %195 = vector.broadcast %152 : vector<1x64xf32> to vector<2x64xf32>
    %196 = arith.addf %194, %195 : vector<2x64xf32>
    %c0_77 = arith.constant 0 : index
    %c0_78 = arith.constant 0 : index
    %197 = vector.load %arg9[%c0_77, %c0_78] : memref<65x10xf32, #tpu.memory_space<vmem>>, vector<64x10xf32>
    %c64_79 = arith.constant 64 : index
    %c0_80 = arith.constant 0 : index
    %198 = vector.load %arg9[%c64_79, %c0_80] : memref<65x10xf32, #tpu.memory_space<vmem>>, vector<1x10xf32>
    %cst_81 = arith.constant dense<0.000000e+00> : vector<2x10xf32>
    %199 = tpu.matmul %196, %197, %cst_81 {dimension_numbers = #tpu.dot_dimension_numbers<[1], [0], [0], [1], [0, 0, 1, 1], [], []>} : vector<2x64xf32>, vector<64x10xf32>, vector<2x10xf32> -> vector<2x10xf32>
    %200 = vector.broadcast %198 : vector<1x10xf32> to vector<2x10xf32>
    %201 = arith.addf %199, %200 : vector<2x10xf32>
    %c0_82 = arith.constant 0 : index
    %c0_83 = arith.constant 0 : index
    %202 = vector.load %arg10[%c0_82, %c0_83] : memref<2x10xf32, #tpu.memory_space<vmem>>, vector<2x10xf32>
    tpu.vector_store %arg10[%c0_82, %c0_83], %201 {strides = array<i32>} : memref<2x10xf32, #tpu.memory_space<vmem>>, vector<2x10xf32>,
    return
  }
}

</mosaic_0001>

<llo_original>
// kernel: tpu_custom_call.1
$region0: #{tpu_custom_call.1}
  #allocation0 [shape = 'u32[]', space=smem, size = 0x4, offset = 0x4, fixed_abs, tag = 'smem constant byte address 0x4 - core index']
  #allocation1 [shape = 'u32[144,128]{1,0:T(1,128)}', space=vmem, size = 0x12000, scoped, tag = 'internal scratch']
  %s0 = inlined_call_operand.hbm [shape: f32[2,512], index: 0, kind: input, shape index: {}]
  %s1 = inlined_call_operand.hbm [shape: f32[513,512], index: 1, kind: input, shape index: {}]
  %s2 = inlined_call_operand.hbm [shape: f32[10,512], index: 2, kind: input, shape index: {}]
  %s3 = inlined_call_operand.hbm [shape: f32[513,256], index: 3, kind: input, shape index: {}]
  %s4 = inlined_call_operand.hbm [shape: f32[18,256], index: 4, kind: input, shape index: {}]
  %s5 = inlined_call_operand.hbm [shape: f32[257,128], index: 5, kind: input, shape index: {}]
  %s6 = inlined_call_operand.hbm [shape: f32[34,128], index: 6, kind: input, shape index: {}]
  %s7 = inlined_call_operand.vmem [shape: f32[129,64], index: 7, kind: input, shape index: {}]
  %s8 = inlined_call_operand.vmem [shape: f32[66,64], index: 8, kind: input, shape index: {}]
  %s9 = inlined_call_operand.vmem [shape: f32[65,10], index: 9, kind: input, shape index: {}]
  %s10 = inlined_call_operand.hbm [shape: f32[2,10], index: 10, kind: output, shape index: {}]
  %s11 = sld [smem:[#allocation0]]
  $region78: #{tpu_custom_call.1} parent=0
    _
  %s13 = ssub.s32 1, %s11
  %s14 = scalar_select 0, %s13, %s11
  $region1: #{tpu_custom_call.1} parent=0
    #allocation2 [shape = 'u8[4096]{0}', space=vmem, size = 0x1000, scoped, tag = 'input window, operand 0, single buffered']
    #allocation3 [shape = 's32[1]{0}', space=sflag, size = 0x4, scoped, tag = 'scoped memory for tpu_custom_call.1']
    #allocation4 [shape = 's32[1]{0}', space=sflag, size = 0x4, scoped, tag = 'scoped memory for tpu_custom_call.1']
    #allocation5 [shape = 'u8[1064960]{0}', space=vmem, size = 0x104000, scoped, tag = 'input window, operand 1, single buffered']
    #allocation6 [shape = 's32[1]{0}', space=sflag, size = 0x4, scoped, tag = 'scoped memory for tpu_custom_call.1']
    #allocation7 [shape = 'u8[32768]{0}', space=vmem, size = 0x8000, scoped, tag = 'input window, operand 2, single buffered']
    #allocation8 [shape = 'u8[532480]{0}', space=vmem, size = 0x82000, scoped, tag = 'input window, operand 3, single buffered']
    #allocation9 [shape = 's32[1]{0}', space=sflag, size = 0x4, scoped, tag = 'scoped memory for tpu_custom_call.1']
    #allocation10 [shape = 'u8[24576]{0}', space=vmem, size = 0x6000, scoped, tag = 'input window, operand 4, single buffered']
    #allocation11 [shape = 'u8[135168]{0}', space=vmem, size = 0x21000, scoped, tag = 'input window, operand 5, single buffered']
    #allocation12 [shape = 's32[1]{0}', space=sflag, size = 0x4, scoped, tag = 'scoped memory for tpu_custom_call.1']
    #allocation13 [shape = 'u8[20480]{0}', space=vmem, size = 0x5000, scoped, tag = 'input window, operand 6, single buffered']
    #allocation14 [shape = 'u8[1024]{0}', space=vmem, size = 0x400, scoped, tag = 'output window, operand 0, single buffered']
    %15 = vsyncpa [#allocation3], 0
    %16 = vsyncpa [#allocation6], 0
    %17 = vsyncpa [#allocation9], 0
    %18 = vsyncpa [#allocation12], 0
    %19 = vsyncpa [#allocation4], 0
    // Predicated region
    $region2: #{tpu_custom_call.1} parent=1 // pred_check
      _
    $region3: #{tpu_custom_call.1} parent=1 // pred_check_branch
      %21 = sbr.rel (0) target = $region5
    $region4: #{tpu_custom_call.1} parent=1 // pred_region
      %s23 = ssub.s32 128, 128
      %24 = vsyncadd [#allocation3], %s23
      %s26 = sshll.u32 [#allocation2], 4
      %s27 = int_to_ptr.vmem [resolvable:$true] %s26
      %29 = dma.hbm_to_vmem [thread:$0]  %s0, 128, %s27, [#allocation3]
    $region5: #{tpu_custom_call.1} parent=1 // pred_fallthru
      _
    // Predicated region
    $region6: #{tpu_custom_call.1} parent=1 // pred_check
      _
    $region7: #{tpu_custom_call.1} parent=1 // pred_check_branch
      %31 = sbr.rel (0) target = $region9
    $region8: #{tpu_custom_call.1} parent=1 // pred_region
      %s33 = ssub.s32 33280, 33280
      %34 = vsyncadd [#allocation6], %s33
      %s35 = sshll.u32 [#allocation5], 4
      %s36 = int_to_ptr.vmem [resolvable:$true] %s35
      %41 = dma.hbm_to_vmem [thread:$0]  %s1, 33280, %s36, [#allocation6], 512, 512, 32
    $region9: #{tpu_custom_call.1} parent=1 // pred_fallthru
      _
    // Predicated region
    $region10: #{tpu_custom_call.1} parent=1 // pred_check
      _
    $region11: #{tpu_custom_call.1} parent=1 // pred_check_branch
      %43 = sbr.rel (0) target = $region13
    $region12: #{tpu_custom_call.1} parent=1 // pred_region
      %s45 = ssub.s32 1024, 1024
      %46 = vsyncadd [#allocation6], %s45
      %s47 = sshll.u32 [#allocation7], 4
      %s48 = int_to_ptr.vmem [resolvable:$true] %s47
      %53 = dma.hbm_to_vmem [thread:$0]  %s2, 1024, %s48, [#allocation6], 512, 512, 32
    $region13: #{tpu_custom_call.1} parent=1 // pred_fallthru
      _
    // Predicated region
    $region14: #{tpu_custom_call.1} parent=1 // pred_check
      _
    $region15: #{tpu_custom_call.1} parent=1 // pred_check_branch
      %55 = sbr.rel (0) target = $region17
    $region16: #{tpu_custom_call.1} parent=1 // pred_region
      %s57 = ssub.s32 16640, 16640
      %58 = vsyncadd [#allocation9], %s57
      %s59 = sshll.u32 [#allocation8], 4
      %s60 = int_to_ptr.vmem [resolvable:$true] %s59
      %65 = dma.hbm_to_vmem [thread:$0]  %s3, 16640, %s60, [#allocation9], 256, 256, 16
    $region17: #{tpu_custom_call.1} parent=1 // pred_fallthru
      _
    // Predicated region
    $region18: #{tpu_custom_call.1} parent=1 // pred_check
      _
    $region19: #{tpu_custom_call.1} parent=1 // pred_check_branch
      %67 = sbr.rel (0) target = $region21
    $region20: #{tpu_custom_call.1} parent=1 // pred_region
      %s69 = ssub.s32 768, 768
      %70 = vsyncadd [#allocation9], %s69
      %s71 = sshll.u32 [#allocation10], 4
      %s72 = int_to_ptr.vmem [resolvable:$true] %s71
      %77 = dma.hbm_to_vmem [thread:$0]  %s4, 768, %s72, [#allocation9], 256, 256, 16
    $region21: #{tpu_custom_call.1} parent=1 // pred_fallthru
      _
    // Predicated region
    $region22: #{tpu_custom_call.1} parent=1 // pred_check
      _
    $region23: #{tpu_custom_call.1} parent=1 // pred_check_branch
      %79 = sbr.rel (0) target = $region25
    $region24: #{tpu_custom_call.1} parent=1 // pred_region
      %s81 = ssub.s32 4224, 4224
      %82 = vsyncadd [#allocation12], %s81
      %s83 = sshll.u32 [#allocation11], 4
      %s84 = int_to_ptr.vmem [resolvable:$true] %s83
      %89 = dma.hbm_to_vmem [thread:$0]  %s5, 4224, %s84, [#allocation12], 128, 128, 8
    $region25: #{tpu_custom_call.1} parent=1 // pred_fallthru
      _
    // Predicated region
    $region26: #{tpu_custom_call.1} parent=1 // pred_check
      _
    $region27: #{tpu_custom_call.1} parent=1 // pred_check_branch
      %91 = sbr.rel (0) target = $region29
    $region28: #{tpu_custom_call.1} parent=1 // pred_region
      %s93 = ssub.s32 640, 640
      %94 = vsyncadd [#allocation12], %s93
      %s95 = sshll.u32 [#allocation13], 4
      %s96 = int_to_ptr.vmem [resolvable:$true] %s95
      %101 = dma.hbm_to_vmem [thread:$0]  %s6, 640, %s96, [#allocation12], 128, 128, 8
    $region29: #{tpu_custom_call.1} parent=1 // pred_fallthru
      _
    // Predicated region
    $region30: #{tpu_custom_call.1} parent=1 // pred_check
      _
    $region31: #{tpu_custom_call.1} parent=1 // pred_check_branch
      %103 = sbr.rel (0) target = $region33
    $region32: #{tpu_custom_call.1} parent=1 // pred_region
      _
    $region33: #{tpu_custom_call.1} parent=1 // pred_fallthru
      _
    // Predicated region
    $region34: #{tpu_custom_call.1} parent=1 // pred_check
      _
    $region35: #{tpu_custom_call.1} parent=1 // pred_check_branch
      %105 = sbr.rel (0) target = $region37
    $region36: #{tpu_custom_call.1} parent=1 // pred_region
      _
    $region37: #{tpu_custom_call.1} parent=1 // pred_fallthru
      _
    // Predicated region
    $region38: #{tpu_custom_call.1} parent=1 // pred_check
      _
    $region39: #{tpu_custom_call.1} parent=1 // pred_check_branch
      %107 = sbr.rel (0) target = $region41
    $region40: #{tpu_custom_call.1} parent=1 // pred_region
      _
    $region41: #{tpu_custom_call.1} parent=1 // pred_fallthru
      _
    // Predicated region
    $region42: #{tpu_custom_call.1} parent=1 // pred_check
      _
    $region43: #{tpu_custom_call.1} parent=1 // pred_check_branch
      %109 = sbr.rel (0) target = $region45
    $region44: #{tpu_custom_call.1} parent=1 // pred_region
      %110 = dma.done [#allocation3], 128
    $region45: #{tpu_custom_call.1} parent=1 // pred_fallthru
      _
    // Predicated region
    $region46: #{tpu_custom_call.1} parent=1 // pred_check
      _
    $region47: #{tpu_custom_call.1} parent=1 // pred_check_branch
      %112 = sbr.rel (0) target = $region49
    $region48: #{tpu_custom_call.1} parent=1 // pred_region
      %113 = dma.done [#allocation6], 33280
    $region49: #{tpu_custom_call.1} parent=1 // pred_fallthru
      _
    // Predicated region
    $region50: #{tpu_custom_call.1} parent=1 // pred_check
      _
    $region51: #{tpu_custom_call.1} parent=1 // pred_check_branch
      %115 = sbr.rel (0) target = $region53
    $region52: #{tpu_custom_call.1} parent=1 // pred_region
      %116 = dma.done [#allocation6], 1024
    $region53: #{tpu_custom_call.1} parent=1 // pred_fallthru
      _
    // Predicated region
    $region54: #{tpu_custom_call.1} parent=1 // pred_check
      _
    $region55: #{tpu_custom_call.1} parent=1 // pred_check_branch
      %118 = sbr.rel (0) target = $region57
    $region56: #{tpu_custom_call.1} parent=1 // pred_region
      %119 = dma.done [#allocation9], 16640
    $region57: #{tpu_custom_call.1} parent=1 // pred_fallthru
      _
    // Predicated region
    $region58: #{tpu_custom_call.1} parent=1 // pred_check
      _
    $region59: #{tpu_custom_call.1} parent=1 // pred_check_branch
      %121 = sbr.rel (0) target = $region61
    $region60: #{tpu_custom_call.1} parent=1 // pred_region
      %122 = dma.done [#allocation9], 768
    $region61: #{tpu_custom_call.1} parent=1 // pred_fallthru
      _
    // Predicated region
    $region62: #{tpu_custom_call.1} parent=1 // pred_check
      _
    $region63: #{tpu_custom_call.1} parent=1 // pred_check_branch
      %124 = sbr.rel (0) target = $region65
    $region64: #{tpu_custom_call.1} parent=1 // pred_region
      %125 = dma.done [#allocation12], 4224
    $region65: #{tpu_custom_call.1} parent=1 // pred_fallthru
      _
    // Predicated region
    $region66: #{tpu_custom_call.1} parent=1 // pred_check
      _
    $region67: #{tpu_custom_call.1} parent=1 // pred_check_branch
      %127 = sbr.rel (0) target = $region69
    $region68: #{tpu_custom_call.1} parent=1 // pred_region
      %128 = dma.done [#allocation12], 640
    $region69: #{tpu_custom_call.1} parent=1 // pred_fallthru
      _
    %v129 = vld [vmem:[#allocation2] sm:$0xff]
    %v130 = vld [vmem:[#allocation5] sm:$0xff]
    %v131 = vld [vmem:[#allocation5 + $0x8] sm:$0xff]
    %v132 = vld [vmem:[#allocation5 + $0x10] sm:$0xff]
    %v133 = vld [vmem:[#allocation5 + $0x18] sm:$0xff]
    %v134 = vld [vmem:[#allocation5 + $0x20] sm:$0xff]
    %v135 = vld [vmem:[#allocation5 + $0x28] sm:$0xff]
    %v136 = vld [vmem:[#allocation5 + $0x30] sm:$0xff]
    %v137 = vld [vmem:[#allocation5 + $0x38] sm:$0xff]
    %v138 = vld [vmem:[#allocation5 + $0x40] sm:$0xff]
    %v139 = vld [vmem:[#allocation5 + $0x48] sm:$0xff]
    %v140 = vld [vmem:[#allocation5 + $0x50] sm:$0xff]
    %v141 = vld [vmem:[#allocation5 + $0x58] sm:$0xff]
    %v142 = vld [vmem:[#allocation5 + $0x60] sm:$0xff]
    %v143 = vld [vmem:[#allocation5 + $0x68] sm:$0xff]
    %v144 = vld [vmem:[#allocation5 + $0x70] sm:$0xff]
    %v145 = vld [vmem:[#allocation5 + $0x78] sm:$0xff]
    %v146 = vld [vmem:[#allocation5 + $0x80] sm:$0xff]
    %v147 = vld [vmem:[#allocation5 + $0x88] sm:$0xff]
    %v148 = vld [vmem:[#allocation5 + $0x90] sm:$0xff]
    %v149 = vld [vmem:[#allocation5 + $0x98] sm:$0xff]
    %v150 = vld [vmem:[#allocation5 + $0xa0] sm:$0xff]
    %v151 = vld [vmem:[#allocation5 + $0xa8] sm:$0xff]
    %v152 = vld [vmem:[#allocation5 + $0xb0] sm:$0xff]
    %v153 = vld [vmem:[#allocation5 + $0xb8] sm:$0xff]
    %v154 = vld [vmem:[#allocation5 + $0xc0] sm:$0xff]
    %v155 = vld [vmem:[#allocation5 + $0xc8] sm:$0xff]
    %v156 = vld [vmem:[#allocation5 + $0xd0] sm:$0xff]
    %v157 = vld [vmem:[#allocation5 + $0xd8] sm:$0xff]
    %v158 = vld [vmem:[#allocation5 + $0xe0] sm:$0xff]
    %v159 = vld [vmem:[#allocation5 + $0xe8] sm:$0xff]
    %v160 = vld [vmem:[#allocation5 + $0xf0] sm:$0xff]
    %v161 = vld [vmem:[#allocation5 + $0xf8] sm:$0xff]
    %v162 = vld [vmem:[#allocation5 + $0x100] sm:$0xff]
    %v163 = vld [vmem:[#allocation5 + $0x108] sm:$0xff]
    %v164 = vld [vmem:[#allocation5 + $0x110] sm:$0xff]
    %v165 = vld [vmem:[#allocation5 + $0x118] sm:$0xff]
    %v166 = vld [vmem:[#allocation5 + $0x120] sm:$0xff]
    %v167 = vld [vmem:[#allocation5 + $0x128] sm:$0xff]
    %v168 = vld [vmem:[#allocation5 + $0x130] sm:$0xff]
    %v169 = vld [vmem:[#allocation5 + $0x138] sm:$0xff]
    %v170 = vld [vmem:[#allocation5 + $0x140] sm:$0xff]
    %v171 = vld [vmem:[#allocation5 + $0x148] sm:$0xff]
    %v172 = vld [vmem:[#allocation5 + $0x150] sm:$0xff]
    %v173 = vld [vmem:[#allocation5 + $0x158] sm:$0xff]
    %v174 = vld [vmem:[#allocation5 + $0x160] sm:$0xff]
    %v175 = vld [vmem:[#allocation5 + $0x168] sm:$0xff]
    %v176 = vld [vmem:[#allocation5 + $0x170] sm:$0xff]
    %v177 = vld [vmem:[#allocation5 + $0x178] sm:$0xff]
    %v178 = vld [vmem:[#allocation5 + $0x180] sm:$0xff]
    %v179 = vld [vmem:[#allocation5 + $0x188] sm:$0xff]
    %v180 = vld [vmem:[#allocation5 + $0x190] sm:$0xff]
    %v181 = vld [vmem:[#allocation5 + $0x198] sm:$0xff]
    %v182 = vld [vmem:[#allocation5 + $0x1a0] sm:$0xff]
    %v183 = vld [vmem:[#allocation5 + $0x1a8] sm:$0xff]
    %v184 = vld [vmem:[#allocation5 + $0x1b0] sm:$0xff]
    %v185 = vld [vmem:[#allocation5 + $0x1b8] sm:$0xff]
    %v186 = vld [vmem:[#allocation5 + $0x1c0] sm:$0xff]
    %v187 = vld [vmem:[#allocation5 + $0x1c8] sm:$0xff]
    %v188 = vld [vmem:[#allocation5 + $0x1d0] sm:$0xff]
    %v189 = vld [vmem:[#allocation5 + $0x1d8] sm:$0xff]
    %v190 = vld [vmem:[#allocation5 + $0x1e0] sm:$0xff]
    %v191 = vld [vmem:[#allocation5 + $0x1e8] sm:$0xff]
    %v192 = vld [vmem:[#allocation5 + $0x1f0] sm:$0xff]
    %v193 = vld [vmem:[#allocation5 + $0x1f8] sm:$0xff]
    %v194 = vld [vmem:[#allocation5 + $0x200] sm:$0xff]
    %v195 = vld [vmem:[#allocation5 + $0x208] sm:$0xff]
    %v196 = vld [vmem:[#allocation5 + $0x210] sm:$0xff]
    %v197 = vld [vmem:[#allocation5 + $0x218] sm:$0xff]
    %v198 = vld [vmem:[#allocation5 + $0x220] sm:$0xff]
    %v199 = vld [vmem:[#allocation5 + $0x228] sm:$0xff]
    %v200 = vld [vmem:[#allocation5 + $0x230] sm:$0xff]
    %v201 = vld [vmem:[#allocation5 + $0x238] sm:$0xff]
    %v202 = vld [vmem:[#allocation5 + $0x240] sm:$0xff]
    %v203 = vld [vmem:[#allocation5 + $0x248] sm:$0xff]
    %v204 = vld [vmem:[#allocation5 + $0x250] sm:$0xff]
    %v205 = vld [vmem:[#allocation5 + $0x258] sm:$0xff]
    %v206 = vld [vmem:[#allocation5 + $0x260] sm:$0xff]
    %v207 = vld [vmem:[#allocation5 + $0x268] sm:$0xff]
    %v208 = vld [vmem:[#allocation5 + $0x270] sm:$0xff]
    %v209 = vld [vmem:[#allocation5 + $0x278] sm:$0xff]
    %v210 = vld [vmem:[#allocation5 + $0x280] sm:$0xff]
    %v211 = vld [vmem:[#allocation5 + $0x288] sm:$0xff]
    %v212 = vld [vmem:[#allocation5 + $0x290] sm:$0xff]
    %v213 = vld [vmem:[#allocation5 + $0x298] sm:$0xff]
    %v214 = vld [vmem:[#allocation5 + $0x2a0] sm:$0xff]
    %v215 = vld [vmem:[#allocation5 + $0x2a8] sm:$0xff]
    %v216 = vld [vmem:[#allocation5 + $0x2b0] sm:$0xff]
    %v217 = vld [vmem:[#allocation5 + $0x2b8] sm:$0xff]
    %v218 = vld [vmem:[#allocation5 + $0x2c0] sm:$0xff]
    %v219 = vld [vmem:[#allocation5 + $0x2c8] sm:$0xff]
    %v220 = vld [vmem:[#allocation5 + $0x2d0] sm:$0xff]
    %v221 = vld [vmem:[#allocation5 + $0x2d8] sm:$0xff]
    %v222 = vld [vmem:[#allocation5 + $0x2e0] sm:$0xff]
    %v223 = vld [vmem:[#allocation5 + $0x2e8] sm:$0xff]
    %v224 = vld [vmem:[#allocation5 + $0x2f0] sm:$0xff]
    %v225 = vld [vmem:[#allocation5 + $0x2f8] sm:$0xff]
    %v226 = vld [vmem:[#allocation5 + $0x300] sm:$0xff]
    %v227 = vld [vmem:[#allocation5 + $0x308] sm:$0xff]
    %v228 = vld [vmem:[#allocation5 + $0x310] sm:$0xff]
    %v229 = vld [vmem:[#allocation5 + $0x318] sm:$0xff]
    %v230 = vld [vmem:[#allocation5 + $0x320] sm:$0xff]
    %v231 = vld [vmem:[#allocation5 + $0x328] sm:$0xff]
    %v232 = vld [vmem:[#allocation5 + $0x330] sm:$0xff]
    %v233 = vld [vmem:[#allocation5 + $0x338] sm:$0xff]
    %v234 = vld [vmem:[#allocation5 + $0x340] sm:$0xff]
    %v235 = vld [vmem:[#allocation5 + $0x348] sm:$0xff]
    %v236 = vld [vmem:[#allocation5 + $0x350] sm:$0xff]
    %v237 = vld [vmem:[#allocation5 + $0x358] sm:$0xff]
    %v238 = vld [vmem:[#allocation5 + $0x360] sm:$0xff]
    %v239 = vld [vmem:[#allocation5 + $0x368] sm:$0xff]
    %v240 = vld [vmem:[#allocation5 + $0x370] sm:$0xff]
    %v241 = vld [vmem:[#allocation5 + $0x378] sm:$0xff]
    %v242 = vld [vmem:[#allocation5 + $0x380] sm:$0xff]
    %v243 = vld [vmem:[#allocation5 + $0x388] sm:$0xff]
    %v244 = vld [vmem:[#allocation5 + $0x390] sm:$0xff]
    %v245 = vld [vmem:[#allocation5 + $0x398] sm:$0xff]
    %v246 = vld [vmem:[#allocation5 + $0x3a0] sm:$0xff]
    %v247 = vld [vmem:[#allocation5 + $0x3a8] sm:$0xff]
    %v248 = vld [vmem:[#allocation5 + $0x3b0] sm:$0xff]
    %v249 = vld [vmem:[#allocation5 + $0x3b8] sm:$0xff]
    %v250 = vld [vmem:[#allocation5 + $0x3c0] sm:$0xff]
    %v251 = vld [vmem:[#allocation5 + $0x3c8] sm:$0xff]
    %v252 = vld [vmem:[#allocation5 + $0x3d0] sm:$0xff]
    %v253 = vld [vmem:[#allocation5 + $0x3d8] sm:$0xff]
    %v254 = vld [vmem:[#allocation5 + $0x3e0] sm:$0xff]
    %v255 = vld [vmem:[#allocation5 + $0x3e8] sm:$0xff]
    %v256 = vld [vmem:[#allocation5 + $0x3f0] sm:$0xff]
    %v257 = vld [vmem:[#allocation5 + $0x3f8] sm:$0xff]
    %v258 = vld [vmem:[#allocation5 + $0x400] sm:$0xff]
    %v259 = vld [vmem:[#allocation5 + $0x408] sm:$0xff]
    %v260 = vld [vmem:[#allocation5 + $0x410] sm:$0xff]
    %v261 = vld [vmem:[#allocation5 + $0x418] sm:$0xff]
    %v262 = vld [vmem:[#allocation5 + $0x420] sm:$0xff]
    %v263 = vld [vmem:[#allocation5 + $0x428] sm:$0xff]
    %v264 = vld [vmem:[#allocation5 + $0x430] sm:$0xff]
    %v265 = vld [vmem:[#allocation5 + $0x438] sm:$0xff]
    %v266 = vld [vmem:[#allocation5 + $0x440] sm:$0xff]
    %v267 = vld [vmem:[#allocation5 + $0x448] sm:$0xff]
    %v268 = vld [vmem:[#allocation5 + $0x450] sm:$0xff]
    %v269 = vld [vmem:[#allocation5 + $0x458] sm:$0xff]
    %v270 = vld [vmem:[#allocation5 + $0x460] sm:$0xff]
    %v271 = vld [vmem:[#allocation5 + $0x468] sm:$0xff]
    %v272 = vld [vmem:[#allocation5 + $0x470] sm:$0xff]
    %v273 = vld [vmem:[#allocation5 + $0x478] sm:$0xff]
    %v274 = vld [vmem:[#allocation5 + $0x480] sm:$0xff]
    %v275 = vld [vmem:[#allocation5 + $0x488] sm:$0xff]
    %v276 = vld [vmem:[#allocation5 + $0x490] sm:$0xff]
    %v277 = vld [vmem:[#allocation5 + $0x498] sm:$0xff]
    %v278 = vld [vmem:[#allocation5 + $0x4a0] sm:$0xff]
    %v279 = vld [vmem:[#allocation5 + $0x4a8] sm:$0xff]
    %v280 = vld [vmem:[#allocation5 + $0x4b0] sm:$0xff]
    %v281 = vld [vmem:[#allocation5 + $0x4b8] sm:$0xff]
    %v282 = vld [vmem:[#allocation5 + $0x4c0] sm:$0xff]
    %v283 = vld [vmem:[#allocation5 + $0x4c8] sm:$0xff]
    %v284 = vld [vmem:[#allocation5 + $0x4d0] sm:$0xff]
    %v285 = vld [vmem:[#allocation5 + $0x4d8] sm:$0xff]
    %v286 = vld [vmem:[#allocation5 + $0x4e0] sm:$0xff]
    %v287 = vld [vmem:[#allocation5 + $0x4e8] sm:$0xff]
    %v288 = vld [vmem:[#allocation5 + $0x4f0] sm:$0xff]
    %v289 = vld [vmem:[#allocation5 + $0x4f8] sm:$0xff]
    %v290 = vld [vmem:[#allocation5 + $0x500] sm:$0xff]
    %v291 = vld [vmem:[#allocation5 + $0x508] sm:$0xff]
    %v292 = vld [vmem:[#allocation5 + $0x510] sm:$0xff]
    %v293 = vld [vmem:[#allocation5 + $0x518] sm:$0xff]
    %v294 = vld [vmem:[#allocation5 + $0x520] sm:$0xff]
    %v295 = vld [vmem:[#allocation5 + $0x528] sm:$0xff]
    %v296 = vld [vmem:[#allocation5 + $0x530] sm:$0xff]
    %v297 = vld [vmem:[#allocation5 + $0x538] sm:$0xff]
    %v298 = vld [vmem:[#allocation5 + $0x540] sm:$0xff]
    %v299 = vld [vmem:[#allocation5 + $0x548] sm:$0xff]
    %v300 = vld [vmem:[#allocation5 + $0x550] sm:$0xff]
    %v301 = vld [vmem:[#allocation5 + $0x558] sm:$0xff]
    %v302 = vld [vmem:[#allocation5 + $0x560] sm:$0xff]
    %v303 = vld [vmem:[#allocation5 + $0x568] sm:$0xff]
    %v304 = vld [vmem:[#allocation5 + $0x570] sm:$0xff]
    %v305 = vld [vmem:[#allocation5 + $0x578] sm:$0xff]
    %v306 = vld [vmem:[#allocation5 + $0x580] sm:$0xff]
    %v307 = vld [vmem:[#allocation5 + $0x588] sm:$0xff]
    %v308 = vld [vmem:[#allocation5 + $0x590] sm:$0xff]
    %v309 = vld [vmem:[#allocation5 + $0x598] sm:$0xff]
    %v310 = vld [vmem:[#allocation5 + $0x5a0] sm:$0xff]
    %v311 = vld [vmem:[#allocation5 + $0x5a8] sm:$0xff]
    %v312 = vld [vmem:[#allocation5 + $0x5b0] sm:$0xff]
    %v313 = vld [vmem:[#allocation5 + $0x5b8] sm:$0xff]
    %v314 = vld [vmem:[#allocation5 + $0x5c0] sm:$0xff]
    %v315 = vld [vmem:[#allocation5 + $0x5c8] sm:$0xff]
    %v316 = vld [vmem:[#allocation5 + $0x5d0] sm:$0xff]
    %v317 = vld [vmem:[#allocation5 + $0x5d8] sm:$0xff]
    %v318 = vld [vmem:[#allocation5 + $0x5e0] sm:$0xff]
    %v319 = vld [vmem:[#allocation5 + $0x5e8] sm:$0xff]
    %v320 = vld [vmem:[#allocation5 + $0x5f0] sm:$0xff]
    %v321 = vld [vmem:[#allocation5 + $0x5f8] sm:$0xff]
    %v322 = vld [vmem:[#allocation5 + $0x600] sm:$0xff]
    %v323 = vld [vmem:[#allocation5 + $0x608] sm:$0xff]
    %v324 = vld [vmem:[#allocation5 + $0x610] sm:$0xff]
    %v325 = vld [vmem:[#allocation5 + $0x618] sm:$0xff]
    %v326 = vld [vmem:[#allocation5 + $0x620] sm:$0xff]
    %v327 = vld [vmem:[#allocation5 + $0x628] sm:$0xff]
    %v328 = vld [vmem:[#allocation5 + $0x630] sm:$0xff]
    %v329 = vld [vmem:[#allocation5 + $0x638] sm:$0xff]
    %v330 = vld [vmem:[#allocation5 + $0x640] sm:$0xff]
    %v331 = vld [vmem:[#allocation5 + $0x648] sm:$0xff]
    %v332 = vld [vmem:[#allocation5 + $0x650] sm:$0xff]
    %v333 = vld [vmem:[#allocation5 + $0x658] sm:$0xff]
    %v334 = vld [vmem:[#allocation5 + $0x660] sm:$0xff]
    %v335 = vld [vmem:[#allocation5 + $0x668] sm:$0xff]
    %v336 = vld [vmem:[#allocation5 + $0x670] sm:$0xff]
    %v337 = vld [vmem:[#allocation5 + $0x678] sm:$0xff]
    %v338 = vld [vmem:[#allocation5 + $0x680] sm:$0xff]
    %v339 = vld [vmem:[#allocation5 + $0x688] sm:$0xff]
    %v340 = vld [vmem:[#allocation5 + $0x690] sm:$0xff]
    %v341 = vld [vmem:[#allocation5 + $0x698] sm:$0xff]
    %v342 = vld [vmem:[#allocation5 + $0x6a0] sm:$0xff]
    %v343 = vld [vmem:[#allocation5 + $0x6a8] sm:$0xff]
    %v344 = vld [vmem:[#allocation5 + $0x6b0] sm:$0xff]
    %v345 = vld [vmem:[#allocation5 + $0x6b8] sm:$0xff]
    %v346 = vld [vmem:[#allocation5 + $0x6c0] sm:$0xff]
    %v347 = vld [vmem:[#allocation5 + $0x6c8] sm:$0xff]
    %v348 = vld [vmem:[#allocation5 + $0x6d0] sm:$0xff]
    %v349 = vld [vmem:[#allocation5 + $0x6d8] sm:$0xff]
    %v350 = vld [vmem:[#allocation5 + $0x6e0] sm:$0xff]
    %v351 = vld [vmem:[#allocation5 + $0x6e8] sm:$0xff]
    %v352 = vld [vmem:[#allocation5 + $0x6f0] sm:$0xff]
    %v353 = vld [vmem:[#allocation5 + $0x6f8] sm:$0xff]
    %v354 = vld [vmem:[#allocation5 + $0x700] sm:$0xff]
    %v355 = vld [vmem:[#allocation5 + $0x708] sm:$0xff]
    %v356 = vld [vmem:[#allocation5 + $0x710] sm:$0xff]
    %v357 = vld [vmem:[#allocation5 + $0x718] sm:$0xff]
    %v358 = vld [vmem:[#allocation5 + $0x720] sm:$0xff]
    %v359 = vld [vmem:[#allocation5 + $0x728] sm:$0xff]
    %v360 = vld [vmem:[#allocation5 + $0x730] sm:$0xff]
    %v361 = vld [vmem:[#allocation5 + $0x738] sm:$0xff]
    %v362 = vld [vmem:[#allocation5 + $0x740] sm:$0xff]
    %v363 = vld [vmem:[#allocation5 + $0x748] sm:$0xff]
    %v364 = vld [vmem:[#allocation5 + $0x750] sm:$0xff]
    %v365 = vld [vmem:[#allocation5 + $0x758] sm:$0xff]
    %v366 = vld [vmem:[#allocation5 + $0x760] sm:$0xff]
    %v367 = vld [vmem:[#allocation5 + $0x768] sm:$0xff]
    %v368 = vld [vmem:[#allocation5 + $0x770] sm:$0xff]
    %v369 = vld [vmem:[#allocation5 + $0x778] sm:$0xff]
    %v370 = vld [vmem:[#allocation5 + $0x780] sm:$0xff]
    %v371 = vld [vmem:[#allocation5 + $0x788] sm:$0xff]
    %v372 = vld [vmem:[#allocation5 + $0x790] sm:$0xff]
    %v373 = vld [vmem:[#allocation5 + $0x798] sm:$0xff]
    %v374 = vld [vmem:[#allocation5 + $0x7a0] sm:$0xff]
    %v375 = vld [vmem:[#allocation5 + $0x7a8] sm:$0xff]
    %v376 = vld [vmem:[#allocation5 + $0x7b0] sm:$0xff]
    %v377 = vld [vmem:[#allocation5 + $0x7b8] sm:$0xff]
    %v378 = vld [vmem:[#allocation5 + $0x7c0] sm:$0xff]
    %v379 = vld [vmem:[#allocation5 + $0x7c8] sm:$0xff]
    %v380 = vld [vmem:[#allocation5 + $0x7d0] sm:$0xff]
    %v381 = vld [vmem:[#allocation5 + $0x7d8] sm:$0xff]
    %v382 = vld [vmem:[#allocation5 + $0x7e0] sm:$0xff]
    %v383 = vld [vmem:[#allocation5 + $0x7e8] sm:$0xff]
    %v384 = vld [vmem:[#allocation5 + $0x7f0] sm:$0xff]
    %v385 = vld [vmem:[#allocation5 + $0x7f8] sm:$0xff]
    %s386 = scalar_lea.vmem [#allocation5], 2048
    %v387 = vld [vmem:[%s386] ss:$8 sm:$0xf]
    %v388 = vld [vmem:[#allocation7] sm:$0xff]
    %v389 = vld [vmem:[#allocation7 + $0x8] sm:$0xff]
    %v390 = vld [vmem:[#allocation7 + $0x10] sm:$0xff]
    %v391 = vld [vmem:[#allocation7 + $0x18] sm:$0xff]
    %s392 = scalar_lea.vmem [#allocation7], 32
    %v393 = vld [vmem:[%s392] ss:$8 sm:$0xf]
    %s394 = scalar_lea.vmem [#allocation7], 33
    %v395 = vld [vmem:[%s394] ss:$8 sm:$0xf]
    %v397 = vlaneseq
    %v398 = vshrl.u32 %v397, 7
    %v399 = vsub.s32 0, %v398
    %v400 = vrot.slane %v387, %v399
    %v401 = vlaneseq
    %v402 = vshrl.u32 %v401, 7
    %v403 = vsub.s32 1, %v402
    %v404 = vrot.slane %v387, %v403
    %v405 = vlaneseq
    %v406 = vshrl.u32 %v405, 7
    %v407 = vsub.s32 2, %v406
    %v408 = vrot.slane %v387, %v407
    %v409 = vlaneseq
    %v410 = vshrl.u32 %v409, 7
    %v411 = vsub.s32 3, %v410
    %v412 = vrot.slane %v387, %v411
    %v418 = vcombine.high %v129, %v129
    %v420 = vunpack.c.l.s4 1983009808
    %v421 = vunpack.c.0.s8 %v420
    %v422 = vlaneseq
    %v423 = vshrl.u32 %v422, 7
    %v424 = vsub.s32 %v421, %v423
    %v425 = vrot.slane %v129, %v424
    %v427 = vunpack.c.l.s4 1983009808
    %v428 = vunpack.c.0.s8 %v427
    %v429 = vlaneseq
    %v430 = vshrl.u32 %v429, 7
    %v431 = vsub.s32 %v428, %v430
    %v432 = vrot.slane %v418, %v431
    %v433 = vcombine.high %v425, %v425
    %v434 = vcombine.high %v432, %v432
    %439 = vmatprep.subr.mxu0 %v131
    %440 = vmatpush1.msra.mxu0 %v130
    %441 = vmatprep.subr.mxu0 %v135
    %442 = vmatpush1.msra.mxu0 %v134
    %443 = vmatprep.subr.mxu0 %v139
    %444 = vmatpush1.msra.mxu0 %v138
    %445 = vmatprep.subr.mxu0 %v143
    %446 = vmatpush1.msra.mxu0 %v142
    %447 = vmatprep.subr.mxu0 %v147
    %448 = vmatpush1.msra.mxu0 %v146
    %449 = vmatprep.subr.mxu0 %v151
    %450 = vmatpush1.msra.mxu0 %v150
    %451 = vmatprep.subr.mxu0 %v155
    %452 = vmatpush1.msra.mxu0 %v154
    %453 = vmatprep.subr.mxu0 %v159
    %454 = vmatpush1.msra.mxu0 %v158
    %455 = vmatprep.subr.mxu0 %v163
    %456 = vmatpush1.msra.mxu0 %v162
    %457 = vmatprep.subr.mxu0 %v167
    %458 = vmatpush1.msra.mxu0 %v166
    %459 = vmatprep.subr.mxu0 %v171
    %460 = vmatpush1.msra.mxu0 %v170
    %461 = vmatprep.subr.mxu0 %v175
    %462 = vmatpush1.msra.mxu0 %v174
    %463 = vmatprep.subr.mxu0 %v179
    %464 = vmatpush1.msra.mxu0 %v178
    %465 = vmatprep.subr.mxu0 %v183
    %466 = vmatpush1.msra.mxu0 %v182
    %467 = vmatprep.subr.mxu0 %v187
    %468 = vmatpush1.msra.mxu0 %v186
    %469 = vmatprep.subr.mxu0 %v191
    %470 = vmatpush1.msra.mxu0 %v190
    %471 = vmatprep.subr.mxu0 %v195
    %472 = vmatpush1.msra.mxu0 %v194
    %473 = vmatprep.subr.mxu0 %v199
    %474 = vmatpush1.msra.mxu0 %v198
    %475 = vmatprep.subr.mxu0 %v203
    %476 = vmatpush1.msra.mxu0 %v202
    %477 = vmatprep.subr.mxu0 %v207
    %478 = vmatpush1.msra.mxu0 %v206
    %479 = vmatprep.subr.mxu0 %v211
    %480 = vmatpush1.msra.mxu0 %v210
    %481 = vmatprep.subr.mxu0 %v215
    %482 = vmatpush1.msra.mxu0 %v214
    %483 = vmatprep.subr.mxu0 %v219
    %484 = vmatpush1.msra.mxu0 %v218
    %485 = vmatprep.subr.mxu0 %v223
    %486 = vmatpush1.msra.mxu0 %v222
    %487 = vmatprep.subr.mxu0 %v227
    %488 = vmatpush1.msra.mxu0 %v226
    %489 = vmatprep.subr.mxu0 %v231
    %490 = vmatpush1.msra.mxu0 %v230
    %491 = vmatprep.subr.mxu0 %v235
    %492 = vmatpush1.msra.mxu0 %v234
    %493 = vmatprep.subr.mxu0 %v239
    %494 = vmatpush1.msra.mxu0 %v238
    %495 = vmatprep.subr.mxu0 %v243
    %496 = vmatpush1.msra.mxu0 %v242
    %497 = vmatprep.subr.mxu0 %v247
    %498 = vmatpush1.msra.mxu0 %v246
    %499 = vmatprep.subr.mxu0 %v251
    %500 = vmatpush1.msra.mxu0 %v250
    %501 = vmatprep.subr.mxu0 %v255
    %502 = vmatpush1.msra.mxu0 %v254
    %503 = vmatprep.mubr.f32.mxu0 %v433
    %504 = vmatmul.mubr.f32.gmra.mrb[0].mxu0 %v425
    %v505 = vpop.f32.mrb[0].mxu0
    %v506 = vadd.f32 %v400, %v505
    %v507 = vpop.f32.mrb[0].mxu0
    %v508 = vadd.f32 %v404, %v507
    %509 = vdwg.mxu0
    %510 = vmatprep.subr.mxu0 %v259
    %511 = vmatpush1.msra.mxu0 %v258
    %512 = vmatprep.subr.mxu0 %v263
    %513 = vmatpush1.msra.mxu0 %v262
    %514 = vmatprep.subr.mxu0 %v267
    %515 = vmatpush1.msra.mxu0 %v266
    %516 = vmatprep.subr.mxu0 %v271
    %517 = vmatpush1.msra.mxu0 %v270
    %518 = vmatprep.subr.mxu0 %v275
    %519 = vmatpush1.msra.mxu0 %v274
    %520 = vmatprep.subr.mxu0 %v279
    %521 = vmatpush1.msra.mxu0 %v278
    %522 = vmatprep.subr.mxu0 %v283
    %523 = vmatpush1.msra.mxu0 %v282
    %524 = vmatprep.subr.mxu0 %v287
    %525 = vmatpush1.msra.mxu0 %v286
    %526 = vmatprep.subr.mxu0 %v291
    %527 = vmatpush1.msra.mxu0 %v290
    %528 = vmatprep.subr.mxu0 %v295
    %529 = vmatpush1.msra.mxu0 %v294
    %530 = vmatprep.subr.mxu0 %v299
    %531 = vmatpush1.msra.mxu0 %v298
    %532 = vmatprep.subr.mxu0 %v303
    %533 = vmatpush1.msra.mxu0 %v302
    %534 = vmatprep.subr.mxu0 %v307
    %535 = vmatpush1.msra.mxu0 %v306
    %536 = vmatprep.subr.mxu0 %v311
    %537 = vmatpush1.msra.mxu0 %v310
    %538 = vmatprep.subr.mxu0 %v315
    %539 = vmatpush1.msra.mxu0 %v314
    %540 = vmatprep.subr.mxu0 %v319
    %541 = vmatpush1.msra.mxu0 %v318
    %542 = vmatprep.subr.mxu0 %v323
    %543 = vmatpush1.msra.mxu0 %v322
    %544 = vmatprep.subr.mxu0 %v327
    %545 = vmatpush1.msra.mxu0 %v326
    %546 = vmatprep.subr.mxu0 %v331
    %547 = vmatpush1.msra.mxu0 %v330
    %548 = vmatprep.subr.mxu0 %v335
    %549 = vmatpush1.msra.mxu0 %v334
    %550 = vmatprep.subr.mxu0 %v339
    %551 = vmatpush1.msra.mxu0 %v338
    %552 = vmatprep.subr.mxu0 %v343
    %553 = vmatpush1.msra.mxu0 %v342
    %554 = vmatprep.subr.mxu0 %v347
    %555 = vmatpush1.msra.mxu0 %v346
    %556 = vmatprep.subr.mxu0 %v351
    %557 = vmatpush1.msra.mxu0 %v350
    %558 = vmatprep.subr.mxu0 %v355
    %559 = vmatpush1.msra.mxu0 %v354
    %560 = vmatprep.subr.mxu0 %v359
    %561 = vmatpush1.msra.mxu0 %v358
    %562 = vmatprep.subr.mxu0 %v363
    %563 = vmatpush1.msra.mxu0 %v362
    %564 = vmatprep.subr.mxu0 %v367
    %565 = vmatpush1.msra.mxu0 %v366
    %566 = vmatprep.subr.mxu0 %v371
    %567 = vmatpush1.msra.mxu0 %v370
    %568 = vmatprep.subr.mxu0 %v375
    %569 = vmatpush1.msra.mxu0 %v374
    %570 = vmatprep.subr.mxu0 %v379
    %571 = vmatpush1.msra.mxu0 %v378
    %572 = vmatprep.subr.mxu0 %v383
    %573 = vmatpush1.msra.mxu0 %v382
    %574 = vmatprep.mubr.f32.mxu0 %v434
    %575 = vmatmul.mubr.f32.gmra.mrb[0].mxu0 %v432
    %v576 = vpop.f32.mrb[0].mxu0
    %v577 = vadd.f32 %v506, %v576
    %v578 = vpop.f32.mrb[0].mxu0
    %v579 = vadd.f32 %v508, %v578
    %580 = vdwg.mxu0
    %581 = vmatprep.subr.mxu0 %v133
    %582 = vmatpush1.msra.mxu0 %v132
    %583 = vmatprep.subr.mxu0 %v137
    %584 = vmatpush1.msra.mxu0 %v136
    %585 = vmatprep.subr.mxu0 %v141
    %586 = vmatpush1.msra.mxu0 %v140
    %587 = vmatprep.subr.mxu0 %v145
    %588 = vmatpush1.msra.mxu0 %v144
    %589 = vmatprep.subr.mxu0 %v149
    %590 = vmatpush1.msra.mxu0 %v148
    %591 = vmatprep.subr.mxu0 %v153
    %592 = vmatpush1.msra.mxu0 %v152
    %593 = vmatprep.subr.mxu0 %v157
    %594 = vmatpush1.msra.mxu0 %v156
    %595 = vmatprep.subr.mxu0 %v161
    %596 = vmatpush1.msra.mxu0 %v160
    %597 = vmatprep.subr.mxu0 %v165
    %598 = vmatpush1.msra.mxu0 %v164
    %599 = vmatprep.subr.mxu0 %v169
    %600 = vmatpush1.msra.mxu0 %v168
    %601 = vmatprep.subr.mxu0 %v173
    %602 = vmatpush1.msra.mxu0 %v172
    %603 = vmatprep.subr.mxu0 %v177
    %604 = vmatpush1.msra.mxu0 %v176
    %605 = vmatprep.subr.mxu0 %v181
    %606 = vmatpush1.msra.mxu0 %v180
    %607 = vmatprep.subr.mxu0 %v185
    %608 = vmatpush1.msra.mxu0 %v184
    %609 = vmatprep.subr.mxu0 %v189
    %610 = vmatpush1.msra.mxu0 %v188
    %611 = vmatprep.subr.mxu0 %v193
    %612 = vmatpush1.msra.mxu0 %v192
    %613 = vmatprep.subr.mxu0 %v197
    %614 = vmatpush1.msra.mxu0 %v196
    %615 = vmatprep.subr.mxu0 %v201
    %616 = vmatpush1.msra.mxu0 %v200
    %617 = vmatprep.subr.mxu0 %v205
    %618 = vmatpush1.msra.mxu0 %v204
    %619 = vmatprep.subr.mxu0 %v209
    %620 = vmatpush1.msra.mxu0 %v208
    %621 = vmatprep.subr.mxu0 %v213
    %622 = vmatpush1.msra.mxu0 %v212
    %623 = vmatprep.subr.mxu0 %v217
    %624 = vmatpush1.msra.mxu0 %v216
    %625 = vmatprep.subr.mxu0 %v221
    %626 = vmatpush1.msra.mxu0 %v220
    %627 = vmatprep.subr.mxu0 %v225
    %628 = vmatpush1.msra.mxu0 %v224
    %629 = vmatprep.subr.mxu0 %v229
    %630 = vmatpush1.msra.mxu0 %v228
    %631 = vmatprep.subr.mxu0 %v233
    %632 = vmatpush1.msra.mxu0 %v232
    %633 = vmatprep.subr.mxu0 %v237
    %634 = vmatpush1.msra.mxu0 %v236
    %635 = vmatprep.subr.mxu0 %v241
    %636 = vmatpush1.msra.mxu0 %v240
    %637 = vmatprep.subr.mxu0 %v245
    %638 = vmatpush1.msra.mxu0 %v244
    %639 = vmatprep.subr.mxu0 %v249
    %640 = vmatpush1.msra.mxu0 %v248
    %641 = vmatprep.subr.mxu0 %v253
    %642 = vmatpush1.msra.mxu0 %v252
    %643 = vmatprep.subr.mxu0 %v257
    %644 = vmatpush1.msra.mxu0 %v256
    %645 = vmatprep.mubr.f32.mxu0 %v433
    %646 = vmatmul.mubr.f32.gmra.mrb[0].mxu0 %v425
    %v647 = vpop.f32.mrb[0].mxu0
    %v648 = vadd.f32 %v408, %v647
    %v649 = vpop.f32.mrb[0].mxu0
    %v650 = vadd.f32 %v412, %v649
    %651 = vdwg.mxu0
    %652 = vmatprep.subr.mxu0 %v261
    %653 = vmatpush1.msra.mxu0 %v260
    %654 = vmatprep.subr.mxu0 %v265
    %655 = vmatpush1.msra.mxu0 %v264
    %656 = vmatprep.subr.mxu0 %v269
    %657 = vmatpush1.msra.mxu0 %v268
    %658 = vmatprep.subr.mxu0 %v273
    %659 = vmatpush1.msra.mxu0 %v272
    %660 = vmatprep.subr.mxu0 %v277
    %661 = vmatpush1.msra.mxu0 %v276
    %662 = vmatprep.subr.mxu0 %v281
    %663 = vmatpush1.msra.mxu0 %v280
    %664 = vmatprep.subr.mxu0 %v285
    %665 = vmatpush1.msra.mxu0 %v284
    %666 = vmatprep.subr.mxu0 %v289
    %667 = vmatpush1.msra.mxu0 %v288
    %668 = vmatprep.subr.mxu0 %v293
    %669 = vmatpush1.msra.mxu0 %v292
    %670 = vmatprep.subr.mxu0 %v297
    %671 = vmatpush1.msra.mxu0 %v296
    %672 = vmatprep.subr.mxu0 %v301
    %673 = vmatpush1.msra.mxu0 %v300
    %674 = vmatprep.subr.mxu0 %v305
    %675 = vmatpush1.msra.mxu0 %v304
    %676 = vmatprep.subr.mxu0 %v309
    %677 = vmatpush1.msra.mxu0 %v308
    %678 = vmatprep.subr.mxu0 %v313
    %679 = vmatpush1.msra.mxu0 %v312
    %680 = vmatprep.subr.mxu0 %v317
    %681 = vmatpush1.msra.mxu0 %v316
    %682 = vmatprep.subr.mxu0 %v321
    %683 = vmatpush1.msra.mxu0 %v320
    %684 = vmatprep.subr.mxu0 %v325
    %685 = vmatpush1.msra.mxu0 %v324
    %686 = vmatprep.subr.mxu0 %v329
    %687 = vmatpush1.msra.mxu0 %v328
    %688 = vmatprep.subr.mxu0 %v333
    %689 = vmatpush1.msra.mxu0 %v332
    %690 = vmatprep.subr.mxu0 %v337
    %691 = vmatpush1.msra.mxu0 %v336
    %692 = vmatprep.subr.mxu0 %v341
    %693 = vmatpush1.msra.mxu0 %v340
    %694 = vmatprep.subr.mxu0 %v345
    %695 = vmatpush1.msra.mxu0 %v344
    %696 = vmatprep.subr.mxu0 %v349
    %697 = vmatpush1.msra.mxu0 %v348
    %698 = vmatprep.subr.mxu0 %v353
    %699 = vmatpush1.msra.mxu0 %v352
    %700 = vmatprep.subr.mxu0 %v357
    %701 = vmatpush1.msra.mxu0 %v356
    %702 = vmatprep.subr.mxu0 %v361
    %703 = vmatpush1.msra.mxu0 %v360
    %704 = vmatprep.subr.mxu0 %v365
    %705 = vmatpush1.msra.mxu0 %v364
    %706 = vmatprep.subr.mxu0 %v369
    %707 = vmatpush1.msra.mxu0 %v368
    %708 = vmatprep.subr.mxu0 %v373
    %709 = vmatpush1.msra.mxu0 %v372
    %710 = vmatprep.subr.mxu0 %v377
    %711 = vmatpush1.msra.mxu0 %v376
    %712 = vmatprep.subr.mxu0 %v381
    %713 = vmatpush1.msra.mxu0 %v380
    %714 = vmatprep.subr.mxu0 %v385
    %715 = vmatpush1.msra.mxu0 %v384
    %716 = vmatprep.mubr.f32.mxu0 %v434
    %717 = vmatmul.mubr.f32.gmra.mrb[0].mxu0 %v432
    %v718 = vpop.f32.mrb[0].mxu0
    %v719 = vadd.f32 %v648, %v718
    %v720 = vpop.f32.mrb[0].mxu0
    %v721 = vadd.f32 %v650, %v720
    %722 = vdwg.mxu0
    %v723 = vmax.f32 %v577, 0.0
    %v724 = vmax.f32 %v579, 0.0
    %v725 = vmax.f32 %v719, 0.0
    %v726 = vmax.f32 %v721, 0.0
    %vm727 = vcmask 1041408
    %v728 = vsel %vm727, %v723, 0.0
    %v729 = vrot.slane %v728, 4
    %v730 = vadd.f32 %v728, %v729
    %v731 = vrot.slane %v730, 2
    %v732 = vadd.f32 %v730, %v731
    %v733 = vrot.slane %v732, 1
    %v734 = vadd.f32 %v732, %v733
    %v735 = vsel %vm727, %v724, 0.0
    %v736 = vrot.slane %v735, 4
    %v737 = vadd.f32 %v735, %v736
    %v738 = vrot.slane %v737, 2
    %v739 = vadd.f32 %v737, %v738
    %v740 = vrot.slane %v739, 1
    %v741 = vadd.f32 %v739, %v740
    %v742 = vsel %vm727, %v725, 0.0
    %v743 = vrot.slane %v742, 4
    %v744 = vadd.f32 %v742, %v743
    %v745 = vrot.slane %v744, 2
    %v746 = vadd.f32 %v744, %v745
    %v747 = vrot.slane %v746, 1
    %v748 = vadd.f32 %v746, %v747
    %v749 = vsel %vm727, %v726, 0.0
    %v750 = vrot.slane %v749, 4
    %v751 = vadd.f32 %v749, %v750
    %v752 = vrot.slane %v751, 2
    %v753 = vadd.f32 %v751, %v752
    %v754 = vrot.slane %v753, 1
    %v755 = vadd.f32 %v753, %v754
    %v756 = vmul.f32 %v723, %v723
    %v757 = vmul.f32 %v724, %v724
    %v758 = vmul.f32 %v725, %v725
    %v759 = vmul.f32 %v726, %v726
    %v760 = vsel %vm727, %v756, 0.0
    %v761 = vrot.slane %v760, 4
    %v762 = vadd.f32 %v760, %v761
    %v763 = vrot.slane %v762, 2
    %v764 = vadd.f32 %v762, %v763
    %v765 = vrot.slane %v764, 1
    %v766 = vadd.f32 %v764, %v765
    %v767 = vsel %vm727, %v757, 0.0
    %v768 = vrot.slane %v767, 4
    %v769 = vadd.f32 %v767, %v768
    %v770 = vrot.slane %v769, 2
    %v771 = vadd.f32 %v769, %v770
    %v772 = vrot.slane %v771, 1
    %v773 = vadd.f32 %v771, %v772
    %v774 = vsel %vm727, %v758, 0.0
    %v775 = vrot.slane %v774, 4
    %v776 = vadd.f32 %v774, %v775
    %v777 = vrot.slane %v776, 2
    %v778 = vadd.f32 %v776, %v777
    %v779 = vrot.slane %v778, 1
    %v780 = vadd.f32 %v778, %v779
    %v781 = vsel %vm727, %v759, 0.0
    %v782 = vrot.slane %v781, 4
    %v783 = vadd.f32 %v781, %v782
    %v784 = vrot.slane %v783, 2
    %v785 = vadd.f32 %v783, %v784
    %v786 = vrot.slane %v785, 1
    %v787 = vadd.f32 %v785, %v786
    %v788 = vmul.f32 %v388, %v734
    %v789 = vmul.f32 %v389, %v741
    %v790 = vmul.f32 %v390, %v748
    %v791 = vmul.f32 %v391, %v755
    %v792 = vadd.f32 %v788, %v789
    %v793 = vadd.f32 %v792, %v790
    %v794 = vadd.f32 %v793, %v791
    %795 = vadd.xlane.f32.xlu0 %v794
    %v796 = vpop.xlane.xlu0 %795
    %v797 = vmul.f32 %v388, %v766
    %v798 = vmul.f32 %v389, %v773
    %v799 = vmul.f32 %v390, %v780
    %v800 = vmul.f32 %v391, %v787
    %v801 = vadd.f32 %v797, %v798
    %v802 = vadd.f32 %v801, %v799
    %v803 = vadd.f32 %v802, %v800
    %804 = vadd.xlane.f32.xlu0 %v803
    %v805 = vpop.xlane.xlu0 %804
    %v806 = vrcp.pop 128.0
    %v807 = vmul.f32 %v796, %v806
    %v808 = vmul.f32 %v805, %v806
    %v809 = vmul.f32 %v807, %v807
    %v810 = vsub.f32 %v808, %v809
    %v811 = vmax.f32 %v810, 0.0
    %v812 = vmul.f32 %v388, %v807
    %v813 = vmul.f32 %v389, %v807
    %v814 = vmul.f32 %v390, %v807
    %v815 = vmul.f32 %v391, %v807
    %v816 = vrot.slane %v812, 4
    %v817 = vadd.f32 %v812, %v816
    %v818 = vrot.slane %v817, 2
    %v819 = vadd.f32 %v817, %v818
    %v820 = vrot.slane %v819, 1
    %v821 = vadd.f32 %v819, %v820
    %v822 = vrot.slane %v813, 4
    %v823 = vadd.f32 %v813, %v822
    %v824 = vrot.slane %v823, 2
    %v825 = vadd.f32 %v823, %v824
    %v826 = vrot.slane %v825, 1
    %v827 = vadd.f32 %v825, %v826
    %v828 = vrot.slane %v814, 4
    %v829 = vadd.f32 %v814, %v828
    %v830 = vrot.slane %v829, 2
    %v831 = vadd.f32 %v829, %v830
    %v832 = vrot.slane %v831, 1
    %v833 = vadd.f32 %v831, %v832
    %v834 = vrot.slane %v815, 4
    %v835 = vadd.f32 %v815, %v834
    %v836 = vrot.slane %v835, 2
    %v837 = vadd.f32 %v835, %v836
    %v838 = vrot.slane %v837, 1
    %v839 = vadd.f32 %v837, %v838
    %v840 = vmul.f32 %v388, %v811
    %v841 = vmul.f32 %v389, %v811
    %v842 = vmul.f32 %v390, %v811
    %v843 = vmul.f32 %v391, %v811
    %v844 = vrot.slane %v840, 4
    %v845 = vadd.f32 %v840, %v844
    %v846 = vrot.slane %v845, 2
    %v847 = vadd.f32 %v845, %v846
    %v848 = vrot.slane %v847, 1
    %v849 = vadd.f32 %v847, %v848
    %v850 = vrot.slane %v841, 4
    %v851 = vadd.f32 %v841, %v850
    %v852 = vrot.slane %v851, 2
    %v853 = vadd.f32 %v851, %v852
    %v854 = vrot.slane %v853, 1
    %v855 = vadd.f32 %v853, %v854
    %v856 = vrot.slane %v842, 4
    %v857 = vadd.f32 %v842, %v856
    %v858 = vrot.slane %v857, 2
    %v859 = vadd.f32 %v857, %v858
    %v860 = vrot.slane %v859, 1
    %v861 = vadd.f32 %v859, %v860
    %v862 = vrot.slane %v843, 4
    %v863 = vadd.f32 %v843, %v862
    %v864 = vrot.slane %v863, 2
    %v865 = vadd.f32 %v863, %v864
    %v866 = vrot.slane %v865, 1
    %v867 = vadd.f32 %v865, %v866
    %v868 = vadd.f32 %v849, 1e-05
    %v869 = vadd.f32 %v855, 1e-05
    %v870 = vadd.f32 %v861, 1e-05
    %v871 = vadd.f32 %v867, 1e-05
    %v872 = vrsqrt.pop %v868
    %v873 = vrsqrt.pop %v869
    %v874 = vrsqrt.pop %v870
    %v875 = vrsqrt.pop %v871
    %v876 = vsub.f32 %v723, %v821
    %v877 = vsub.f32 %v724, %v827
    %v878 = vsub.f32 %v725, %v833
    %v879 = vsub.f32 %v726, %v839
    %v884 = vcombine.low %v872, %v873
    %v885 = vcombine.low %v874, %v875
    %v887 = vunpack.c.l.s4 1966171168
    %v888 = vunpack.c.0.s8 %v887
    %v889 = vlaneseq
    %v890 = vshrl.u32 %v889, 7
    %v891 = vsub.s32 %v888, %v890
    %v892 = vrot.slane %v884, %v891
    %v894 = vunpack.c.l.s4 1966171168
    %v895 = vunpack.c.0.s8 %v894
    %v896 = vlaneseq
    %v897 = vshrl.u32 %v896, 7
    %v898 = vsub.s32 %v895, %v897
    %v899 = vrot.slane %v885, %v898
    %v900 = vcombine.low %v892, %v899
    %v902 = vunpack.c.l.s4 1966171168
    %v903 = vunpack.c.0.s8 %v902
    %v904 = vlaneseq
    %v905 = vshrl.u32 %v904, 7
    %v906 = vsub.s32 %v903, %v905
    %v907 = vrot.slane %v900, %v906
    %v909 = vmul.f32 %v393, %v907
    %v911 = vlaneseq
    %v912 = vshrl.u32 %v911, 7
    %v913 = vsub.s32 0, %v912
    %v914 = vrot.slane %v909, %v913
    %v915 = vlaneseq
    %v916 = vshrl.u32 %v915, 7
    %v917 = vsub.s32 1, %v916
    %v918 = vrot.slane %v909, %v917
    %v919 = vlaneseq
    %v920 = vshrl.u32 %v919, 7
    %v921 = vsub.s32 2, %v920
    %v922 = vrot.slane %v909, %v921
    %v923 = vlaneseq
    %v924 = vshrl.u32 %v923, 7
    %v925 = vsub.s32 3, %v924
    %v926 = vrot.slane %v909, %v925
    %v931 = vmul.f32 %v876, %v914
    %v932 = vmul.f32 %v877, %v918
    %v933 = vmul.f32 %v878, %v922
    %v934 = vmul.f32 %v879, %v926
    %v936 = vlaneseq
    %v937 = vshrl.u32 %v936, 7
    %v938 = vsub.s32 0, %v937
    %v939 = vrot.slane %v395, %v938
    %v940 = vlaneseq
    %v941 = vshrl.u32 %v940, 7
    %v942 = vsub.s32 1, %v941
    %v943 = vrot.slane %v395, %v942
    %v944 = vlaneseq
    %v945 = vshrl.u32 %v944, 7
    %v946 = vsub.s32 2, %v945
    %v947 = vrot.slane %v395, %v946
    %v948 = vlaneseq
    %v949 = vshrl.u32 %v948, 7
    %v950 = vsub.s32 3, %v949
    %v951 = vrot.slane %v395, %v950
    %v956 = vadd.f32 %v931, %v939
    %v957 = vadd.f32 %v932, %v943
    %v958 = vadd.f32 %v933, %v947
    %v959 = vadd.f32 %v934, %v951
    %v960 = vld [vmem:[#allocation8] sm:$0xff]
    %v961 = vld [vmem:[#allocation8 + $0x8] sm:$0xff]
    %v962 = vld [vmem:[#allocation8 + $0x10] sm:$0xff]
    %v963 = vld [vmem:[#allocation8 + $0x18] sm:$0xff]
    %v964 = vld [vmem:[#allocation8 + $0x20] sm:$0xff]
    %v965 = vld [vmem:[#allocation8 + $0x28] sm:$0xff]
    %v966 = vld [vmem:[#allocation8 + $0x30] sm:$0xff]
    %v967 = vld [vmem:[#allocation8 + $0x38] sm:$0xff]
    %v968 = vld [vmem:[#allocation8 + $0x40] sm:$0xff]
    %v969 = vld [vmem:[#allocation8 + $0x48] sm:$0xff]
    %v970 = vld [vmem:[#allocation8 + $0x50] sm:$0xff]
    %v971 = vld [vmem:[#allocation8 + $0x58] sm:$0xff]
    %v972 = vld [vmem:[#allocation8 + $0x60] sm:$0xff]
    %v973 = vld [vmem:[#allocation8 + $0x68] sm:$0xff]
    %v974 = vld [vmem:[#allocation8 + $0x70] sm:$0xff]
    %v975 = vld [vmem:[#allocation8 + $0x78] sm:$0xff]
    %v976 = vld [vmem:[#allocation8 + $0x80] sm:$0xff]
    %v977 = vld [vmem:[#allocation8 + $0x88] sm:$0xff]
    %v978 = vld [vmem:[#allocation8 + $0x90] sm:$0xff]
    %v979 = vld [vmem:[#allocation8 + $0x98] sm:$0xff]
    %v980 = vld [vmem:[#allocation8 + $0xa0] sm:$0xff]
    %v981 = vld [vmem:[#allocation8 + $0xa8] sm:$0xff]
    %v982 = vld [vmem:[#allocation8 + $0xb0] sm:$0xff]
    %v983 = vld [vmem:[#allocation8 + $0xb8] sm:$0xff]
    %v984 = vld [vmem:[#allocation8 + $0xc0] sm:$0xff]
    %v985 = vld [vmem:[#allocation8 + $0xc8] sm:$0xff]
    %v986 = vld [vmem:[#allocation8 + $0xd0] sm:$0xff]
    %v987 = vld [vmem:[#allocation8 + $0xd8] sm:$0xff]
    %v988 = vld [vmem:[#allocation8 + $0xe0] sm:$0xff]
    %v989 = vld [vmem:[#allocation8 + $0xe8] sm:$0xff]
    %v990 = vld [vmem:[#allocation8 + $0xf0] sm:$0xff]
    %v991 = vld [vmem:[#allocation8 + $0xf8] sm:$0xff]
    %v992 = vld [vmem:[#allocation8 + $0x100] sm:$0xff]
    %v993 = vld [vmem:[#allocation8 + $0x108] sm:$0xff]
    %v994 = vld [vmem:[#allocation8 + $0x110] sm:$0xff]
    %v995 = vld [vmem:[#allocation8 + $0x118] sm:$0xff]
    %v996 = vld [vmem:[#allocation8 + $0x120] sm:$0xff]
    %v997 = vld [vmem:[#allocation8 + $0x128] sm:$0xff]
    %v998 = vld [vmem:[#allocation8 + $0x130] sm:$0xff]
    %v999 = vld [vmem:[#allocation8 + $0x138] sm:$0xff]
    %v1000 = vld [vmem:[#allocation8 + $0x140] sm:$0xff]
    %v1001 = vld [vmem:[#allocation8 + $0x148] sm:$0xff]
    %v1002 = vld [vmem:[#allocation8 + $0x150] sm:$0xff]
    %v1003 = vld [vmem:[#allocation8 + $0x158] sm:$0xff]
    %v1004 = vld [vmem:[#allocation8 + $0x160] sm:$0xff]
    %v1005 = vld [vmem:[#allocation8 + $0x168] sm:$0xff]
    %v1006 = vld [vmem:[#allocation8 + $0x170] sm:$0xff]
    %v1007 = vld [vmem:[#allocation8 + $0x178] sm:$0xff]
    %v1008 = vld [vmem:[#allocation8 + $0x180] sm:$0xff]
    %v1009 = vld [vmem:[#allocation8 + $0x188] sm:$0xff]
    %v1010 = vld [vmem:[#allocation8 + $0x190] sm:$0xff]
    %v1011 = vld [vmem:[#allocation8 + $0x198] sm:$0xff]
    %v1012 = vld [vmem:[#allocation8 + $0x1a0] sm:$0xff]
    %v1013 = vld [vmem:[#allocation8 + $0x1a8] sm:$0xff]
    %v1014 = vld [vmem:[#allocation8 + $0x1b0] sm:$0xff]
    %v1015 = vld [vmem:[#allocation8 + $0x1b8] sm:$0xff]
    %v1016 = vld [vmem:[#allocation8 + $0x1c0] sm:$0xff]
    %v1017 = vld [vmem:[#allocation8 + $0x1c8] sm:$0xff]
    %v1018 = vld [vmem:[#allocation8 + $0x1d0] sm:$0xff]
    %v1019 = vld [vmem:[#allocation8 + $0x1d8] sm:$0xff]
    %v1020 = vld [vmem:[#allocation8 + $0x1e0] sm:$0xff]
    %v1021 = vld [vmem:[#allocation8 + $0x1e8] sm:$0xff]
    %v1022 = vld [vmem:[#allocation8 + $0x1f0] sm:$0xff]
    %v1023 = vld [vmem:[#allocation8 + $0x1f8] sm:$0xff]
    %v1024 = vld [vmem:[#allocation8 + $0x200] sm:$0xff]
    %v1025 = vld [vmem:[#allocation8 + $0x208] sm:$0xff]
    %v1026 = vld [vmem:[#allocation8 + $0x210] sm:$0xff]
    %v1027 = vld [vmem:[#allocation8 + $0x218] sm:$0xff]
    %v1028 = vld [vmem:[#allocation8 + $0x220] sm:$0xff]
    %v1029 = vld [vmem:[#allocation8 + $0x228] sm:$0xff]
    %v1030 = vld [vmem:[#allocation8 + $0x230] sm:$0xff]
    %v1031 = vld [vmem:[#allocation8 + $0x238] sm:$0xff]
    %v1032 = vld [vmem:[#allocation8 + $0x240] sm:$0xff]
    %v1033 = vld [vmem:[#allocation8 + $0x248] sm:$0xff]
    %v1034 = vld [vmem:[#allocation8 + $0x250] sm:$0xff]
    %v1035 = vld [vmem:[#allocation8 + $0x258] sm:$0xff]
    %v1036 = vld [vmem:[#allocation8 + $0x260] sm:$0xff]
    %v1037 = vld [vmem:[#allocation8 + $0x268] sm:$0xff]
    %v1038 = vld [vmem:[#allocation8 + $0x270] sm:$0xff]
    %v1039 = vld [vmem:[#allocation8 + $0x278] sm:$0xff]
    %v1040 = vld [vmem:[#allocation8 + $0x280] sm:$0xff]
    %v1041 = vld [vmem:[#allocation8 + $0x288] sm:$0xff]
    %v1042 = vld [vmem:[#allocation8 + $0x290] sm:$0xff]
    %v1043 = vld [vmem:[#allocation8 + $0x298] sm:$0xff]
    %v1044 = vld [vmem:[#allocation8 + $0x2a0] sm:$0xff]
    %v1045 = vld [vmem:[#allocation8 + $0x2a8] sm:$0xff]
    %v1046 = vld [vmem:[#allocation8 + $0x2b0] sm:$0xff]
    %v1047 = vld [vmem:[#allocation8 + $0x2b8] sm:$0xff]
    %v1048 = vld [vmem:[#allocation8 + $0x2c0] sm:$0xff]
    %v1049 = vld [vmem:[#allocation8 + $0x2c8] sm:$0xff]
    %v1050 = vld [vmem:[#allocation8 + $0x2d0] sm:$0xff]
    %v1051 = vld [vmem:[#allocation8 + $0x2d8] sm:$0xff]
    %v1052 = vld [vmem:[#allocation8 + $0x2e0] sm:$0xff]
    %v1053 = vld [vmem:[#allocation8 + $0x2e8] sm:$0xff]
    %v1054 = vld [vmem:[#allocation8 + $0x2f0] sm:$0xff]
    %v1055 = vld [vmem:[#allocation8 + $0x2f8] sm:$0xff]
    %v1056 = vld [vmem:[#allocation8 + $0x300] sm:$0xff]
    %v1057 = vld [vmem:[#allocation8 + $0x308] sm:$0xff]
    %v1058 = vld [vmem:[#allocation8 + $0x310] sm:$0xff]
    %v1059 = vld [vmem:[#allocation8 + $0x318] sm:$0xff]
    %v1060 = vld [vmem:[#allocation8 + $0x320] sm:$0xff]
    %v1061 = vld [vmem:[#allocation8 + $0x328] sm:$0xff]
    %v1062 = vld [vmem:[#allocation8 + $0x330] sm:$0xff]
    %v1063 = vld [vmem:[#allocation8 + $0x338] sm:$0xff]
    %v1064 = vld [vmem:[#allocation8 + $0x340] sm:$0xff]
    %v1065 = vld [vmem:[#allocation8 + $0x348] sm:$0xff]
    %v1066 = vld [vmem:[#allocation8 + $0x350] sm:$0xff]
    %v1067 = vld [vmem:[#allocation8 + $0x358] sm:$0xff]
    %v1068 = vld [vmem:[#allocation8 + $0x360] sm:$0xff]
    %v1069 = vld [vmem:[#allocation8 + $0x368] sm:$0xff]
    %v1070 = vld [vmem:[#allocation8 + $0x370] sm:$0xff]
    %v1071 = vld [vmem:[#allocation8 + $0x378] sm:$0xff]
    %v1072 = vld [vmem:[#allocation8 + $0x380] sm:$0xff]
    %v1073 = vld [vmem:[#allocation8 + $0x388] sm:$0xff]
    %v1074 = vld [vmem:[#allocation8 + $0x390] sm:$0xff]
    %v1075 = vld [vmem:[#allocation8 + $0x398] sm:$0xff]
    %v1076 = vld [vmem:[#allocation8 + $0x3a0] sm:$0xff]
    %v1077 = vld [vmem:[#allocation8 + $0x3a8] sm:$0xff]
    %v1078 = vld [vmem:[#allocation8 + $0x3b0] sm:$0xff]
    %v1079 = vld [vmem:[#allocation8 + $0x3b8] sm:$0xff]
    %v1080 = vld [vmem:[#allocation8 + $0x3c0] sm:$0xff]
    %v1081 = vld [vmem:[#allocation8 + $0x3c8] sm:$0xff]
    %v1082 = vld [vmem:[#allocation8 + $0x3d0] sm:$0xff]
    %v1083 = vld [vmem:[#allocation8 + $0x3d8] sm:$0xff]
    %v1084 = vld [vmem:[#allocation8 + $0x3e0] sm:$0xff]
    %v1085 = vld [vmem:[#allocation8 + $0x3e8] sm:$0xff]
    %v1086 = vld [vmem:[#allocation8 + $0x3f0] sm:$0xff]
    %v1087 = vld [vmem:[#allocation8 + $0x3f8] sm:$0xff]
    %s1088 = scalar_lea.vmem [#allocation8], 1024
    %v1089 = vld [vmem:[%s1088] ss:$8 sm:$0x3]
    %v1090 = vld [vmem:[#allocation10] sm:$0xff]
    %v1091 = vld [vmem:[#allocation10 + $0x8] sm:$0xff]
    %v1092 = vld [vmem:[#allocation10 + $0x10] sm:$0xff]
    %v1093 = vld [vmem:[#allocation10 + $0x18] sm:$0xff]
    %s1094 = scalar_lea.vmem [#allocation10], 32
    %v1095 = vld [vmem:[%s1094] ss:$8 sm:$0x3]
    %s1096 = scalar_lea.vmem [#allocation10], 33
    %v1097 = vld [vmem:[%s1096] ss:$8 sm:$0x3]
    %v1099 = vlaneseq
    %v1100 = vshrl.u32 %v1099, 7
    %v1101 = vsub.s32 0, %v1100
    %v1102 = vrot.slane %v1089, %v1101
    %v1103 = vlaneseq
    %v1104 = vshrl.u32 %v1103, 7
    %v1105 = vsub.s32 1, %v1104
    %v1106 = vrot.slane %v1089, %v1105
    %1109 = vmatprep.subr.mxu0 %v961
    %1110 = vmatpush1.msra.mxu0 %v960
    %1111 = vmatprep.subr.mxu0 %v963
    %1112 = vmatpush1.msra.mxu0 %v962
    %1113 = vmatprep.subr.mxu0 %v965
    %1114 = vmatpush1.msra.mxu0 %v964
    %1115 = vmatprep.subr.mxu0 %v967
    %1116 = vmatpush1.msra.mxu0 %v966
    %1117 = vmatprep.subr.mxu0 %v969
    %1118 = vmatpush1.msra.mxu0 %v968
    %1119 = vmatprep.subr.mxu0 %v971
    %1120 = vmatpush1.msra.mxu0 %v970
    %1121 = vmatprep.subr.mxu0 %v973
    %1122 = vmatpush1.msra.mxu0 %v972
    %1123 = vmatprep.subr.mxu0 %v975
    %1124 = vmatpush1.msra.mxu0 %v974
    %1125 = vmatprep.subr.mxu0 %v977
    %1126 = vmatpush1.msra.mxu0 %v976
    %1127 = vmatprep.subr.mxu0 %v979
    %1128 = vmatpush1.msra.mxu0 %v978
    %1129 = vmatprep.subr.mxu0 %v981
    %1130 = vmatpush1.msra.mxu0 %v980
    %1131 = vmatprep.subr.mxu0 %v983
    %1132 = vmatpush1.msra.mxu0 %v982
    %1133 = vmatprep.subr.mxu0 %v985
    %1134 = vmatpush1.msra.mxu0 %v984
    %1135 = vmatprep.subr.mxu0 %v987
    %1136 = vmatpush1.msra.mxu0 %v986
    %1137 = vmatprep.subr.mxu0 %v989
    %1138 = vmatpush1.msra.mxu0 %v988
    %1139 = vmatprep.subr.mxu0 %v991
    %1140 = vmatpush1.msra.mxu0 %v990
    %1141 = vmatprep.subr.mxu0 %v993
    %1142 = vmatpush1.msra.mxu0 %v992
    %1143 = vmatprep.subr.mxu0 %v995
    %1144 = vmatpush1.msra.mxu0 %v994
    %1145 = vmatprep.subr.mxu0 %v997
    %1146 = vmatpush1.msra.mxu0 %v996
    %1147 = vmatprep.subr.mxu0 %v999
    %1148 = vmatpush1.msra.mxu0 %v998
    %1149 = vmatprep.subr.mxu0 %v1001
    %1150 = vmatpush1.msra.mxu0 %v1000
    %1151 = vmatprep.subr.mxu0 %v1003
    %1152 = vmatpush1.msra.mxu0 %v1002
    %1153 = vmatprep.subr.mxu0 %v1005
    %1154 = vmatpush1.msra.mxu0 %v1004
    %1155 = vmatprep.subr.mxu0 %v1007
    %1156 = vmatpush1.msra.mxu0 %v1006
    %1157 = vmatprep.subr.mxu0 %v1009
    %1158 = vmatpush1.msra.mxu0 %v1008
    %1159 = vmatprep.subr.mxu0 %v1011
    %1160 = vmatpush1.msra.mxu0 %v1010
    %1161 = vmatprep.subr.mxu0 %v1013
    %1162 = vmatpush1.msra.mxu0 %v1012
    %1163 = vmatprep.subr.mxu0 %v1015
    %1164 = vmatpush1.msra.mxu0 %v1014
    %1165 = vmatprep.subr.mxu0 %v1017
    %1166 = vmatpush1.msra.mxu0 %v1016
    %1167 = vmatprep.subr.mxu0 %v1019
    %1168 = vmatpush1.msra.mxu0 %v1018
    %1169 = vmatprep.subr.mxu0 %v1021
    %1170 = vmatpush1.msra.mxu0 %v1020
    %1171 = vmatprep.subr.mxu0 %v1023
    %1172 = vmatpush1.msra.mxu0 %v1022
    %1173 = vmatprep.mubr.f32.mxu0 %v957
    %1174 = vmatmul.mubr.f32.gmra.mrb[0].mxu0 %v956
    %v1175 = vpop.f32.mrb[0].mxu0
    %v1176 = vadd.f32 %v1102, %v1175
    %v1177 = vpop.f32.mrb[0].mxu0
    %v1178 = vadd.f32 %v1106, %v1177
    %1179 = vdwg.mxu0
    %1180 = vmatprep.subr.mxu0 %v1025
    %1181 = vmatpush1.msra.mxu0 %v1024
    %1182 = vmatprep.subr.mxu0 %v1027
    %1183 = vmatpush1.msra.mxu0 %v1026
    %1184 = vmatprep.subr.mxu0 %v1029
    %1185 = vmatpush1.msra.mxu0 %v1028
    %1186 = vmatprep.subr.mxu0 %v1031
    %1187 = vmatpush1.msra.mxu0 %v1030
    %1188 = vmatprep.subr.mxu0 %v1033
    %1189 = vmatpush1.msra.mxu0 %v1032
    %1190 = vmatprep.subr.mxu0 %v1035
    %1191 = vmatpush1.msra.mxu0 %v1034
    %1192 = vmatprep.subr.mxu0 %v1037
    %1193 = vmatpush1.msra.mxu0 %v1036
    %1194 = vmatprep.subr.mxu0 %v1039
    %1195 = vmatpush1.msra.mxu0 %v1038
    %1196 = vmatprep.subr.mxu0 %v1041
    %1197 = vmatpush1.msra.mxu0 %v1040
    %1198 = vmatprep.subr.mxu0 %v1043
    %1199 = vmatpush1.msra.mxu0 %v1042
    %1200 = vmatprep.subr.mxu0 %v1045
    %1201 = vmatpush1.msra.mxu0 %v1044
    %1202 = vmatprep.subr.mxu0 %v1047
    %1203 = vmatpush1.msra.mxu0 %v1046
    %1204 = vmatprep.subr.mxu0 %v1049
    %1205 = vmatpush1.msra.mxu0 %v1048
    %1206 = vmatprep.subr.mxu0 %v1051
    %1207 = vmatpush1.msra.mxu0 %v1050
    %1208 = vmatprep.subr.mxu0 %v1053
    %1209 = vmatpush1.msra.mxu0 %v1052
    %1210 = vmatprep.subr.mxu0 %v1055
    %1211 = vmatpush1.msra.mxu0 %v1054
    %1212 = vmatprep.subr.mxu0 %v1057
    %1213 = vmatpush1.msra.mxu0 %v1056
    %1214 = vmatprep.subr.mxu0 %v1059
    %1215 = vmatpush1.msra.mxu0 %v1058
    %1216 = vmatprep.subr.mxu0 %v1061
    %1217 = vmatpush1.msra.mxu0 %v1060
    %1218 = vmatprep.subr.mxu0 %v1063
    %1219 = vmatpush1.msra.mxu0 %v1062
    %1220 = vmatprep.subr.mxu0 %v1065
    %1221 = vmatpush1.msra.mxu0 %v1064
    %1222 = vmatprep.subr.mxu0 %v1067
    %1223 = vmatpush1.msra.mxu0 %v1066
    %1224 = vmatprep.subr.mxu0 %v1069
    %1225 = vmatpush1.msra.mxu0 %v1068
    %1226 = vmatprep.subr.mxu0 %v1071
    %1227 = vmatpush1.msra.mxu0 %v1070
    %1228 = vmatprep.subr.mxu0 %v1073
    %1229 = vmatpush1.msra.mxu0 %v1072
    %1230 = vmatprep.subr.mxu0 %v1075
    %1231 = vmatpush1.msra.mxu0 %v1074
    %1232 = vmatprep.subr.mxu0 %v1077
    %1233 = vmatpush1.msra.mxu0 %v1076
    %1234 = vmatprep.subr.mxu0 %v1079
    %1235 = vmatpush1.msra.mxu0 %v1078
    %1236 = vmatprep.subr.mxu0 %v1081
    %1237 = vmatpush1.msra.mxu0 %v1080
    %1238 = vmatprep.subr.mxu0 %v1083
    %1239 = vmatpush1.msra.mxu0 %v1082
    %1240 = vmatprep.subr.mxu0 %v1085
    %1241 = vmatpush1.msra.mxu0 %v1084
    %1242 = vmatprep.subr.mxu0 %v1087
    %1243 = vmatpush1.msra.mxu0 %v1086
    %1244 = vmatprep.mubr.f32.mxu0 %v959
    %1245 = vmatmul.mubr.f32.gmra.mrb[0].mxu0 %v958
    %v1246 = vpop.f32.mrb[0].mxu0
    %v1247 = vadd.f32 %v1176, %v1246
    %v1248 = vpop.f32.mrb[0].mxu0
    %v1249 = vadd.f32 %v1178, %v1248
    %1250 = vdwg.mxu0
    %v1251 = vmax.f32 %v1247, 0.0
    %v1252 = vmax.f32 %v1249, 0.0
    %v1253 = vsel %vm727, %v1251, 0.0
    %v1254 = vrot.slane %v1253, 4
    %v1255 = vadd.f32 %v1253, %v1254
    %v1256 = vrot.slane %v1255, 2
    %v1257 = vadd.f32 %v1255, %v1256
    %v1258 = vrot.slane %v1257, 1
    %v1259 = vadd.f32 %v1257, %v1258
    %v1260 = vsel %vm727, %v1252, 0.0
    %v1261 = vrot.slane %v1260, 4
    %v1262 = vadd.f32 %v1260, %v1261
    %v1263 = vrot.slane %v1262, 2
    %v1264 = vadd.f32 %v1262, %v1263
    %v1265 = vrot.slane %v1264, 1
    %v1266 = vadd.f32 %v1264, %v1265
    %v1267 = vmul.f32 %v1251, %v1251
    %v1268 = vmul.f32 %v1252, %v1252
    %v1269 = vsel %vm727, %v1267, 0.0
    %v1270 = vrot.slane %v1269, 4
    %v1271 = vadd.f32 %v1269, %v1270
    %v1272 = vrot.slane %v1271, 2
    %v1273 = vadd.f32 %v1271, %v1272
    %v1274 = vrot.slane %v1273, 1
    %v1275 = vadd.f32 %v1273, %v1274
    %v1276 = vsel %vm727, %v1268, 0.0
    %v1277 = vrot.slane %v1276, 4
    %v1278 = vadd.f32 %v1276, %v1277
    %v1279 = vrot.slane %v1278, 2
    %v1280 = vadd.f32 %v1278, %v1279
    %v1281 = vrot.slane %v1280, 1
    %v1282 = vadd.f32 %v1280, %v1281
    %v1283 = vmul.f32 %v1090, %v1259
    %v1284 = vmul.f32 %v1091, %v1266
    %v1285 = vmul.f32 %v1092, %v1259
    %v1286 = vmul.f32 %v1093, %v1266
    %v1287 = vadd.f32 %v1283, %v1284
    %1288 = vadd.xlane.f32.xlu0 %v1287
    %v1289 = vpop.xlane.xlu0 %1288
    %v1290 = vadd.f32 %v1285, %v1286
    %1291 = vadd.xlane.f32.xlu0 %v1290
    %v1292 = vpop.xlane.xlu0 %1291
    %v1293 = vmul.f32 %v1090, %v1275
    %v1294 = vmul.f32 %v1091, %v1282
    %v1295 = vmul.f32 %v1092, %v1275
    %v1296 = vmul.f32 %v1093, %v1282
    %v1297 = vadd.f32 %v1293, %v1294
    %1298 = vadd.xlane.f32.xlu0 %v1297
    %v1299 = vpop.xlane.xlu0 %1298
    %v1300 = vadd.f32 %v1295, %v1296
    %1301 = vadd.xlane.f32.xlu0 %v1300
    %v1302 = vpop.xlane.xlu0 %1301
    %v1303 = vrcp.pop 32.0
    %v1304 = vmul.f32 %v1289, %v1303
    %v1305 = vmul.f32 %v1292, %v1303
    %v1306 = vmul.f32 %v1299, %v1303
    %v1307 = vmul.f32 %v1302, %v1303
    %v1308 = vmul.f32 %v1304, %v1304
    %v1309 = vmul.f32 %v1305, %v1305
    %v1310 = vsub.f32 %v1306, %v1308
    %v1311 = vsub.f32 %v1307, %v1309
    %v1312 = vmax.f32 %v1310, 0.0
    %v1313 = vmax.f32 %v1311, 0.0
    %v1314 = vmul.f32 %v1090, %v1304
    %v1315 = vmul.f32 %v1091, %v1304
    %v1316 = vmul.f32 %v1092, %v1305
    %v1317 = vmul.f32 %v1093, %v1305
    %v1318 = vadd.f32 %v1314, %v1316
    %v1319 = vrot.slane %v1318, 4
    %v1320 = vadd.f32 %v1318, %v1319
    %v1321 = vrot.slane %v1320, 2
    %v1322 = vadd.f32 %v1320, %v1321
    %v1323 = vrot.slane %v1322, 1
    %v1324 = vadd.f32 %v1322, %v1323
    %v1325 = vadd.f32 %v1315, %v1317
    %v1326 = vrot.slane %v1325, 4
    %v1327 = vadd.f32 %v1325, %v1326
    %v1328 = vrot.slane %v1327, 2
    %v1329 = vadd.f32 %v1327, %v1328
    %v1330 = vrot.slane %v1329, 1
    %v1331 = vadd.f32 %v1329, %v1330
    %v1332 = vmul.f32 %v1090, %v1312
    %v1333 = vmul.f32 %v1091, %v1312
    %v1334 = vmul.f32 %v1092, %v1313
    %v1335 = vmul.f32 %v1093, %v1313
    %v1336 = vadd.f32 %v1332, %v1334
    %v1337 = vrot.slane %v1336, 4
    %v1338 = vadd.f32 %v1336, %v1337
    %v1339 = vrot.slane %v1338, 2
    %v1340 = vadd.f32 %v1338, %v1339
    %v1341 = vrot.slane %v1340, 1
    %v1342 = vadd.f32 %v1340, %v1341
    %v1343 = vadd.f32 %v1333, %v1335
    %v1344 = vrot.slane %v1343, 4
    %v1345 = vadd.f32 %v1343, %v1344
    %v1346 = vrot.slane %v1345, 2
    %v1347 = vadd.f32 %v1345, %v1346
    %v1348 = vrot.slane %v1347, 1
    %v1349 = vadd.f32 %v1347, %v1348
    %v1350 = vadd.f32 %v1342, 1e-05
    %v1351 = vadd.f32 %v1349, 1e-05
    %v1352 = vrsqrt.pop %v1350
    %v1353 = vrsqrt.pop %v1351
    %v1354 = vsub.f32 %v1251, %v1324
    %v1355 = vsub.f32 %v1252, %v1331
    %v1358 = vcombine.low %v1352, %v1353
    %v1360 = vunpack.c.l.s4 1966171168
    %v1361 = vunpack.c.0.s8 %v1360
    %v1362 = vlaneseq
    %v1363 = vshrl.u32 %v1362, 7
    %v1364 = vsub.s32 %v1361, %v1363
    %v1365 = vrot.slane %v1358, %v1364
    %v1367 = vunpack.c.l.s4 1966171168
    %v1368 = vunpack.c.0.s8 %v1367
    %v1369 = vlaneseq
    %v1370 = vshrl.u32 %v1369, 7
    %v1371 = vsub.s32 %v1368, %v1370
    %v1372 = vrot.slane %v1365, %v1371
    %v1374 = vmul.f32 %v1095, %v1372
    %v1376 = vlaneseq
    %v1377 = vshrl.u32 %v1376, 7
    %v1378 = vsub.s32 0, %v1377
    %v1379 = vrot.slane %v1374, %v1378
    %v1380 = vlaneseq
    %v1381 = vshrl.u32 %v1380, 7
    %v1382 = vsub.s32 1, %v1381
    %v1383 = vrot.slane %v1374, %v1382
    %v1386 = vmul.f32 %v1354, %v1379
    %v1387 = vmul.f32 %v1355, %v1383
    %v1389 = vlaneseq
    %v1390 = vshrl.u32 %v1389, 7
    %v1391 = vsub.s32 0, %v1390
    %v1392 = vrot.slane %v1097, %v1391
    %v1393 = vlaneseq
    %v1394 = vshrl.u32 %v1393, 7
    %v1395 = vsub.s32 1, %v1394
    %v1396 = vrot.slane %v1097, %v1395
    %v1399 = vadd.f32 %v1386, %v1392
    %v1400 = vadd.f32 %v1387, %v1396
    %v1401 = vld [vmem:[#allocation11] sm:$0xff]
    %v1402 = vld [vmem:[#allocation11 + $0x8] sm:$0xff]
    %v1403 = vld [vmem:[#allocation11 + $0x10] sm:$0xff]
    %v1404 = vld [vmem:[#allocation11 + $0x18] sm:$0xff]
    %v1405 = vld [vmem:[#allocation11 + $0x20] sm:$0xff]
    %v1406 = vld [vmem:[#allocation11 + $0x28] sm:$0xff]
    %v1407 = vld [vmem:[#allocation11 + $0x30] sm:$0xff]
    %v1408 = vld [vmem:[#allocation11 + $0x38] sm:$0xff]
    %v1409 = vld [vmem:[#allocation11 + $0x40] sm:$0xff]
    %v1410 = vld [vmem:[#allocation11 + $0x48] sm:$0xff]
    %v1411 = vld [vmem:[#allocation11 + $0x50] sm:$0xff]
    %v1412 = vld [vmem:[#allocation11 + $0x58] sm:$0xff]
    %v1413 = vld [vmem:[#allocation11 + $0x60] sm:$0xff]
    %v1414 = vld [vmem:[#allocation11 + $0x68] sm:$0xff]
    %v1415 = vld [vmem:[#allocation11 + $0x70] sm:$0xff]
    %v1416 = vld [vmem:[#allocation11 + $0x78] sm:$0xff]
    %v1417 = vld [vmem:[#allocation11 + $0x80] sm:$0xff]
    %v1418 = vld [vmem:[#allocation11 + $0x88] sm:$0xff]
    %v1419 = vld [vmem:[#allocation11 + $0x90] sm:$0xff]
    %v1420 = vld [vmem:[#allocation11 + $0x98] sm:$0xff]
    %v1421 = vld [vmem:[#allocation11 + $0xa0] sm:$0xff]
    %v1422 = vld [vmem:[#allocation11 + $0xa8] sm:$0xff]
    %v1423 = vld [vmem:[#allocation11 + $0xb0] sm:$0xff]
    %v1424 = vld [vmem:[#allocation11 + $0xb8] sm:$0xff]
    %v1425 = vld [vmem:[#allocation11 + $0xc0] sm:$0xff]
    %v1426 = vld [vmem:[#allocation11 + $0xc8] sm:$0xff]
    %v1427 = vld [vmem:[#allocation11 + $0xd0] sm:$0xff]
    %v1428 = vld [vmem:[#allocation11 + $0xd8] sm:$0xff]
    %v1429 = vld [vmem:[#allocation11 + $0xe0] sm:$0xff]
    %v1430 = vld [vmem:[#allocation11 + $0xe8] sm:$0xff]
    %v1431 = vld [vmem:[#allocation11 + $0xf0] sm:$0xff]
    %v1432 = vld [vmem:[#allocation11 + $0xf8] sm:$0xff]
    %v1433 = vld [vmem:[#allocation11 + $0x100] sm:$0x1]
    %v1434 = vld [vmem:[#allocation13] sm:$0xff]
    %v1435 = vld [vmem:[#allocation13 + $0x8] sm:$0xff]
    %v1436 = vld [vmem:[#allocation13 + $0x10] sm:$0xff]
    %v1437 = vld [vmem:[#allocation13 + $0x18] sm:$0xff]
    %v1438 = vld [vmem:[#allocation13 + $0x20] sm:$0x1]
    %v1439 = vld [vmem:[#allocation13 + $0x21] sm:$0x1]
    %v1440 = vlaneseq
    %v1441 = vshrl.u32 %v1440, 7
    %v1442 = vsub.s32 0, %v1441
    %v1443 = vrot.slane %v1433, %v1442
    %1444 = vmatprep.subr.mxu0 0.0
    %1445 = vmatpush1.msra.mxu0 %v1401
    %1446 = vmatprep.subr.mxu0 0.0
    %1447 = vmatpush1.msra.mxu0 %v1402
    %1448 = vmatprep.subr.mxu0 0.0
    %1449 = vmatpush1.msra.mxu0 %v1403
    %1450 = vmatprep.subr.mxu0 0.0
    %1451 = vmatpush1.msra.mxu0 %v1404
    %1452 = vmatprep.subr.mxu0 0.0
    %1453 = vmatpush1.msra.mxu0 %v1405
    %1454 = vmatprep.subr.mxu0 0.0
    %1455 = vmatpush1.msra.mxu0 %v1406
    %1456 = vmatprep.subr.mxu0 0.0
    %1457 = vmatpush1.msra.mxu0 %v1407
    %1458 = vmatprep.subr.mxu0 0.0
    %1459 = vmatpush1.msra.mxu0 %v1408
    %1460 = vmatprep.subr.mxu0 0.0
    %1461 = vmatpush1.msra.mxu0 %v1409
    %1462 = vmatprep.subr.mxu0 0.0
    %1463 = vmatpush1.msra.mxu0 %v1410
    %1464 = vmatprep.subr.mxu0 0.0
    %1465 = vmatpush1.msra.mxu0 %v1411
    %1466 = vmatprep.subr.mxu0 0.0
    %1467 = vmatpush1.msra.mxu0 %v1412
    %1468 = vmatprep.subr.mxu0 0.0
    %1469 = vmatpush1.msra.mxu0 %v1413
    %1470 = vmatprep.subr.mxu0 0.0
    %1471 = vmatpush1.msra.mxu0 %v1414
    %1472 = vmatprep.subr.mxu0 0.0
    %1473 = vmatpush1.msra.mxu0 %v1415
    %1474 = vmatprep.subr.mxu0 0.0
    %1475 = vmatpush1.msra.mxu0 %v1416
    %1476 = vmatprep.subr.mxu0 0.0
    %1477 = vmatpush1.msra.mxu0 %v1417
    %1478 = vmatprep.subr.mxu0 0.0
    %1479 = vmatpush1.msra.mxu0 %v1418
    %1480 = vmatprep.subr.mxu0 0.0
    %1481 = vmatpush1.msra.mxu0 %v1419
    %1482 = vmatprep.subr.mxu0 0.0
    %1483 = vmatpush1.msra.mxu0 %v1420
    %1484 = vmatprep.subr.mxu0 0.0
    %1485 = vmatpush1.msra.mxu0 %v1421
    %1486 = vmatprep.subr.mxu0 0.0
    %1487 = vmatpush1.msra.mxu0 %v1422
    %1488 = vmatprep.subr.mxu0 0.0
    %1489 = vmatpush1.msra.mxu0 %v1423
    %1490 = vmatprep.subr.mxu0 0.0
    %1491 = vmatpush1.msra.mxu0 %v1424
    %1492 = vmatprep.subr.mxu0 0.0
    %1493 = vmatpush1.msra.mxu0 %v1425
    %1494 = vmatprep.subr.mxu0 0.0
    %1495 = vmatpush1.msra.mxu0 %v1426
    %1496 = vmatprep.subr.mxu0 0.0
    %1497 = vmatpush1.msra.mxu0 %v1427
    %1498 = vmatprep.subr.mxu0 0.0
    %1499 = vmatpush1.msra.mxu0 %v1428
    %1500 = vmatprep.subr.mxu0 0.0
    %1501 = vmatpush1.msra.mxu0 %v1429
    %1502 = vmatprep.subr.mxu0 0.0
    %1503 = vmatpush1.msra.mxu0 %v1430
    %1504 = vmatprep.subr.mxu0 0.0
    %1505 = vmatpush1.msra.mxu0 %v1431
    %1506 = vmatprep.subr.mxu0 0.0
    %1507 = vmatpush1.msra.mxu0 %v1432
    %1508 = vmatprep.mubr.f32.mxu0 %v1400
    %1509 = vmatmul.mubr.f32.gmra.mrb[0].mxu0 %v1399
    %v1510 = vpop.f32.mrb[0].mxu0
    %v1511 = vadd.f32 %v1443, %v1510
    %v1512 = vpop.f32.mrb[0].mxu0
    %1513 = vdwg.mxu0
    %v1514 = vmax.f32 %v1511, 0.0
    %v1515 = vsel %vm727, %v1514, 0.0
    %v1516 = vrot.slane %v1515, 4
    %v1517 = vadd.f32 %v1515, %v1516
    %v1518 = vrot.slane %v1517, 2
    %v1519 = vadd.f32 %v1517, %v1518
    %v1520 = vrot.slane %v1519, 1
    %v1521 = vadd.f32 %v1519, %v1520
    %v1522 = vmul.f32 %v1514, %v1514
    %v1523 = vsel %vm727, %v1522, 0.0
    %v1524 = vrot.slane %v1523, 4
    %v1525 = vadd.f32 %v1523, %v1524
    %v1526 = vrot.slane %v1525, 2
    %v1527 = vadd.f32 %v1525, %v1526
    %v1528 = vrot.slane %v1527, 1
    %v1529 = vadd.f32 %v1527, %v1528
    %v1530 = vmul.f32 %v1434, %v1521
    %v1531 = vmul.f32 %v1435, %v1521
    %v1532 = vmul.f32 %v1436, %v1521
    %v1533 = vmul.f32 %v1437, %v1521
    %1534 = vadd.xlane.f32.xlu0 %v1530
    %v1535 = vpop.xlane.xlu0 %1534
    %1536 = vadd.xlane.f32.xlu0 %v1531
    %v1537 = vpop.xlane.xlu0 %1536
    %1538 = vadd.xlane.f32.xlu0 %v1532
    %v1539 = vpop.xlane.xlu0 %1538
    %1540 = vadd.xlane.f32.xlu0 %v1533
    %v1541 = vpop.xlane.xlu0 %1540
    %v1542 = vmul.f32 %v1434, %v1529
    %v1543 = vmul.f32 %v1435, %v1529
    %v1544 = vmul.f32 %v1436, %v1529
    %v1545 = vmul.f32 %v1437, %v1529
    %1546 = vadd.xlane.f32.xlu0 %v1542
    %v1547 = vpop.xlane.xlu0 %1546
    %1548 = vadd.xlane.f32.xlu0 %v1543
    %v1549 = vpop.xlane.xlu0 %1548
    %1550 = vadd.xlane.f32.xlu0 %v1544
    %v1551 = vpop.xlane.xlu0 %1550
    %1552 = vadd.xlane.f32.xlu0 %v1545
    %v1553 = vpop.xlane.xlu0 %1552
    %v1554 = vrcp.pop 8.0
    %v1555 = vmul.f32 %v1535, %v1554
    %v1556 = vmul.f32 %v1537, %v1554
    %v1557 = vmul.f32 %v1539, %v1554
    %v1558 = vmul.f32 %v1541, %v1554
    %v1559 = vmul.f32 %v1547, %v1554
    %v1560 = vmul.f32 %v1549, %v1554
    %v1561 = vmul.f32 %v1551, %v1554
    %v1562 = vmul.f32 %v1553, %v1554
    %v1563 = vmul.f32 %v1555, %v1555
    %v1564 = vmul.f32 %v1556, %v1556
    %v1565 = vmul.f32 %v1557, %v1557
    %v1566 = vmul.f32 %v1558, %v1558
    %v1567 = vsub.f32 %v1559, %v1563
    %v1568 = vsub.f32 %v1560, %v1564
    %v1569 = vsub.f32 %v1561, %v1565
    %v1570 = vsub.f32 %v1562, %v1566
    %v1571 = vmax.f32 %v1567, 0.0
    %v1572 = vmax.f32 %v1568, 0.0
    %v1573 = vmax.f32 %v1569, 0.0
    %v1574 = vmax.f32 %v1570, 0.0
    %v1575 = vmul.f32 %v1434, %v1555
    %v1576 = vmul.f32 %v1435, %v1556
    %v1577 = vmul.f32 %v1436, %v1557
    %v1578 = vmul.f32 %v1437, %v1558
    %v1579 = vadd.f32 %v1575, %v1576
    %v1580 = vadd.f32 %v1579, %v1577
    %v1581 = vadd.f32 %v1580, %v1578
    %v1582 = vrot.slane %v1581, 4
    %v1583 = vadd.f32 %v1581, %v1582
    %v1584 = vrot.slane %v1583, 2
    %v1585 = vadd.f32 %v1583, %v1584
    %v1586 = vrot.slane %v1585, 1
    %v1587 = vadd.f32 %v1585, %v1586
    %v1588 = vmul.f32 %v1434, %v1571
    %v1589 = vmul.f32 %v1435, %v1572
    %v1590 = vmul.f32 %v1436, %v1573
    %v1591 = vmul.f32 %v1437, %v1574
    %v1592 = vadd.f32 %v1588, %v1589
    %v1593 = vadd.f32 %v1592, %v1590
    %v1594 = vadd.f32 %v1593, %v1591
    %v1595 = vrot.slane %v1594, 4
    %v1596 = vadd.f32 %v1594, %v1595
    %v1597 = vrot.slane %v1596, 2
    %v1598 = vadd.f32 %v1596, %v1597
    %v1599 = vrot.slane %v1598, 1
    %v1600 = vadd.f32 %v1598, %v1599
    %v1601 = vadd.f32 %v1600, 1e-05
    %v1602 = vrsqrt.pop %v1601
    %v1603 = vsub.f32 %v1514, %v1587
    %v1604 = vmul.f32 %v1438, %v1602
    %v1605 = vlaneseq
    %v1606 = vshrl.u32 %v1605, 7
    %v1607 = vsub.s32 0, %v1606
    %v1608 = vrot.slane %v1604, %v1607
    %v1609 = vmul.f32 %v1603, %v1608
    %v1610 = vlaneseq
    %v1611 = vshrl.u32 %v1610, 7
    %v1612 = vsub.s32 0, %v1611
    %v1613 = vrot.slane %v1439, %v1612
    %v1614 = vadd.f32 %v1609, %v1613
    %v1615 = vld [vmem:[%s7] sm:$0xff]
    %v1616 = vld [vmem:[%s7 + $0x8] sm:$0xff]
    %v1617 = vld [vmem:[%s7 + $0x10] sm:$0xff]
    %v1618 = vld [vmem:[%s7 + $0x18] sm:$0xff]
    %v1619 = vld [vmem:[%s7 + $0x20] sm:$0xff]
    %v1620 = vld [vmem:[%s7 + $0x28] sm:$0xff]
    %v1621 = vld [vmem:[%s7 + $0x30] sm:$0xff]
    %v1622 = vld [vmem:[%s7 + $0x38] sm:$0xff]
    %v1623 = vld [vmem:[%s7 + $0x40] sm:$0xff]
    %v1624 = vld [vmem:[%s7 + $0x48] sm:$0xff]
    %v1625 = vld [vmem:[%s7 + $0x50] sm:$0xff]
    %v1626 = vld [vmem:[%s7 + $0x58] sm:$0xff]
    %v1627 = vld [vmem:[%s7 + $0x60] sm:$0xff]
    %v1628 = vld [vmem:[%s7 + $0x68] sm:$0xff]
    %v1629 = vld [vmem:[%s7 + $0x70] sm:$0xff]
    %v1630 = vld [vmem:[%s7 + $0x78] sm:$0xff]
    %v1631 = vld [vmem:[%s7 + $0x80] sm:$0x1]
    %v1632 = vld [vmem:[%s8] sm:$0xff]
    %v1633 = vld [vmem:[%s8 + $0x8] sm:$0xff]
    %v1634 = vld [vmem:[%s8 + $0x10] sm:$0xff]
    %v1635 = vld [vmem:[%s8 + $0x18] sm:$0xff]
    %v1636 = vld [vmem:[%s8 + $0x20] sm:$0xff]
    %v1637 = vld [vmem:[%s8 + $0x28] sm:$0xff]
    %v1638 = vld [vmem:[%s8 + $0x30] sm:$0xff]
    %v1639 = vld [vmem:[%s8 + $0x38] sm:$0xff]
    %v1640 = vld [vmem:[%s8 + $0x40] sm:$0x1]
    %v1641 = vld [vmem:[%s8 + $0x41] sm:$0x1]
    %v1642 = vlaneseq
    %v1643 = vshrl.u32 %v1642, 7
    %v1644 = vsub.s32 0, %v1643
    %v1645 = vrot.slane %v1631, %v1644
    %1646 = vmatprep.subr.mxu0 0.0
    %1647 = vmatpush1.msra.mxu0 %v1615
    %1648 = vmatprep.subr.mxu0 0.0
    %1649 = vmatpush1.msra.mxu0 %v1616
    %1650 = vmatprep.subr.mxu0 0.0
    %1651 = vmatpush1.msra.mxu0 %v1617
    %1652 = vmatprep.subr.mxu0 0.0
    %1653 = vmatpush1.msra.mxu0 %v1618
    %1654 = vmatprep.subr.mxu0 0.0
    %1655 = vmatpush1.msra.mxu0 %v1619
    %1656 = vmatprep.subr.mxu0 0.0
    %1657 = vmatpush1.msra.mxu0 %v1620
    %1658 = vmatprep.subr.mxu0 0.0
    %1659 = vmatpush1.msra.mxu0 %v1621
    %1660 = vmatprep.subr.mxu0 0.0
    %1661 = vmatpush1.msra.mxu0 %v1622
    %1662 = vmatprep.subr.mxu0 0.0
    %1663 = vmatpush1.msra.mxu0 %v1623
    %1664 = vmatprep.subr.mxu0 0.0
    %1665 = vmatpush1.msra.mxu0 %v1624
    %1666 = vmatprep.subr.mxu0 0.0
    %1667 = vmatpush1.msra.mxu0 %v1625
    %1668 = vmatprep.subr.mxu0 0.0
    %1669 = vmatpush1.msra.mxu0 %v1626
    %1670 = vmatprep.subr.mxu0 0.0
    %1671 = vmatpush1.msra.mxu0 %v1627
    %1672 = vmatprep.subr.mxu0 0.0
    %1673 = vmatpush1.msra.mxu0 %v1628
    %1674 = vmatprep.subr.mxu0 0.0
    %1675 = vmatpush1.msra.mxu0 %v1629
    %1676 = vmatprep.subr.mxu0 0.0
    %1677 = vmatpush1.msra.mxu0 %v1630
    %1678 = vmatprep.subr.mxu0 0.0
    %1679 = vmatpush1.msra.mxu0 0.0
    %1680 = vmatprep.subr.mxu0 0.0
    %1681 = vmatpush1.msra.mxu0 0.0
    %1682 = vmatprep.subr.mxu0 0.0
    %1683 = vmatpush1.msra.mxu0 0.0
    %1684 = vmatprep.subr.mxu0 0.0
    %1685 = vmatpush1.msra.mxu0 0.0
    %1686 = vmatprep.subr.mxu0 0.0
    %1687 = vmatpush1.msra.mxu0 0.0
    %1688 = vmatprep.subr.mxu0 0.0
    %1689 = vmatpush1.msra.mxu0 0.0
    %1690 = vmatprep.subr.mxu0 0.0
    %1691 = vmatpush1.msra.mxu0 0.0
    %1692 = vmatprep.subr.mxu0 0.0
    %1693 = vmatpush1.msra.mxu0 0.0
    %1694 = vmatprep.subr.mxu0 0.0
    %1695 = vmatpush1.msra.mxu0 0.0
    %1696 = vmatprep.subr.mxu0 0.0
    %1697 = vmatpush1.msra.mxu0 0.0
    %1698 = vmatprep.subr.mxu0 0.0
    %1699 = vmatpush1.msra.mxu0 0.0
    %1700 = vmatprep.subr.mxu0 0.0
    %1701 = vmatpush1.msra.mxu0 0.0
    %1702 = vmatprep.subr.mxu0 0.0
    %1703 = vmatpush1.msra.mxu0 0.0
    %1704 = vmatprep.subr.mxu0 0.0
    %1705 = vmatpush1.msra.mxu0 0.0
    %1706 = vmatprep.subr.mxu0 0.0
    %1707 = vmatpush1.msra.mxu0 0.0
    %1708 = vmatprep.subr.mxu0 0.0
    %1709 = vmatpush1.msra.mxu0 0.0
    %1710 = vmatprep.mubr.f32.mxu0 0.0
    %1711 = vmatmul.mubr.f32.gmra.mrb[0].mxu0 %v1614
    %v1712 = vpop.f32.mrb[0].mxu0
    %v1713 = vadd.f32 %v1645, %v1712
    %v1714 = vpop.f32.mrb[0].mxu0
    %1715 = vdwg.mxu0
    %v1716 = vmax.f32 %v1713, 0.0
    %vm1717 = vcmask 517120
    %v1718 = vsel %vm1717, %v1716, 0.0
    %v1719 = vrot.slane %v1718, 4
    %v1720 = vadd.f32 %v1718, %v1719
    %v1721 = vrot.slane %v1720, 2
    %v1722 = vadd.f32 %v1720, %v1721
    %v1723 = vrot.slane %v1722, 1
    %v1724 = vadd.f32 %v1722, %v1723
    %v1725 = vmul.f32 %v1716, %v1716
    %v1726 = vsel %vm1717, %v1725, 0.0
    %v1727 = vrot.slane %v1726, 4
    %v1728 = vadd.f32 %v1726, %v1727
    %v1729 = vrot.slane %v1728, 2
    %v1730 = vadd.f32 %v1728, %v1729
    %v1731 = vrot.slane %v1730, 1
    %v1732 = vadd.f32 %v1730, %v1731
    %v1733 = vmul.f32 %v1632, %v1724
    %v1734 = vmul.f32 %v1633, %v1724
    %v1735 = vmul.f32 %v1634, %v1724
    %v1736 = vmul.f32 %v1635, %v1724
    %v1737 = vmul.f32 %v1636, %v1724
    %v1738 = vmul.f32 %v1637, %v1724
    %v1739 = vmul.f32 %v1638, %v1724
    %v1740 = vmul.f32 %v1639, %v1724
    %vm1741 = vcmask 523264
    %v1742 = vsel %vm1741, %v1733, 0.0
    %1743 = vadd.xlane.f32.xlu0 %v1742
    %v1744 = vpop.xlane.xlu0 %1743
    %v1745 = vsel %vm1741, %v1734, 0.0
    %1746 = vadd.xlane.f32.xlu0 %v1745
    %v1747 = vpop.xlane.xlu0 %1746
    %v1748 = vsel %vm1741, %v1735, 0.0
    %1749 = vadd.xlane.f32.xlu0 %v1748
    %v1750 = vpop.xlane.xlu0 %1749
    %v1751 = vsel %vm1741, %v1736, 0.0
    %1752 = vadd.xlane.f32.xlu0 %v1751
    %v1753 = vpop.xlane.xlu0 %1752
    %v1754 = vsel %vm1741, %v1737, 0.0
    %1755 = vadd.xlane.f32.xlu0 %v1754
    %v1756 = vpop.xlane.xlu0 %1755
    %v1757 = vsel %vm1741, %v1738, 0.0
    %1758 = vadd.xlane.f32.xlu0 %v1757
    %v1759 = vpop.xlane.xlu0 %1758
    %v1760 = vsel %vm1741, %v1739, 0.0
    %1761 = vadd.xlane.f32.xlu0 %v1760
    %v1762 = vpop.xlane.xlu0 %1761
    %v1763 = vsel %vm1741, %v1740, 0.0
    %1764 = vadd.xlane.f32.xlu0 %v1763
    %v1765 = vpop.xlane.xlu0 %1764
    %v1766 = vmul.f32 %v1632, %v1732
    %v1767 = vmul.f32 %v1633, %v1732
    %v1768 = vmul.f32 %v1634, %v1732
    %v1769 = vmul.f32 %v1635, %v1732
    %v1770 = vmul.f32 %v1636, %v1732
    %v1771 = vmul.f32 %v1637, %v1732
    %v1772 = vmul.f32 %v1638, %v1732
    %v1773 = vmul.f32 %v1639, %v1732
    %v1774 = vsel %vm1741, %v1766, 0.0
    %1775 = vadd.xlane.f32.xlu0 %v1774
    %v1776 = vpop.xlane.xlu0 %1775
    %v1777 = vsel %vm1741, %v1767, 0.0
    %1778 = vadd.xlane.f32.xlu0 %v1777
    %v1779 = vpop.xlane.xlu0 %1778
    %v1780 = vsel %vm1741, %v1768, 0.0
    %1781 = vadd.xlane.f32.xlu0 %v1780
    %v1782 = vpop.xlane.xlu0 %1781
    %v1783 = vsel %vm1741, %v1769, 0.0
    %1784 = vadd.xlane.f32.xlu0 %v1783
    %v1785 = vpop.xlane.xlu0 %1784
    %v1786 = vsel %vm1741, %v1770, 0.0
    %1787 = vadd.xlane.f32.xlu0 %v1786
    %v1788 = vpop.xlane.xlu0 %1787
    %v1789 = vsel %vm1741, %v1771, 0.0
    %1790 = vadd.xlane.f32.xlu0 %v1789
    %v1791 = vpop.xlane.xlu0 %1790
    %v1792 = vsel %vm1741, %v1772, 0.0
    %1793 = vadd.xlane.f32.xlu0 %v1792
    %v1794 = vpop.xlane.xlu0 %1793
    %v1795 = vsel %vm1741, %v1773, 0.0
    %1796 = vadd.xlane.f32.xlu0 %v1795
    %v1797 = vpop.xlane.xlu0 %1796
    %v1798 = vrcp.pop 2.0
    %v1799 = vmul.f32 %v1744, %v1798
    %v1800 = vmul.f32 %v1747, %v1798
    %v1801 = vmul.f32 %v1750, %v1798
    %v1802 = vmul.f32 %v1753, %v1798
    %v1803 = vmul.f32 %v1756, %v1798
    %v1804 = vmul.f32 %v1759, %v1798
    %v1805 = vmul.f32 %v1762, %v1798
    %v1806 = vmul.f32 %v1765, %v1798
    %v1807 = vmul.f32 %v1776, %v1798
    %v1808 = vmul.f32 %v1779, %v1798
    %v1809 = vmul.f32 %v1782, %v1798
    %v1810 = vmul.f32 %v1785, %v1798
    %v1811 = vmul.f32 %v1788, %v1798
    %v1812 = vmul.f32 %v1791, %v1798
    %v1813 = vmul.f32 %v1794, %v1798
    %v1814 = vmul.f32 %v1797, %v1798
    %v1815 = vmul.f32 %v1799, %v1799
    %v1816 = vmul.f32 %v1800, %v1800
    %v1817 = vmul.f32 %v1801, %v1801
    %v1818 = vmul.f32 %v1802, %v1802
    %v1819 = vmul.f32 %v1803, %v1803
    %v1820 = vmul.f32 %v1804, %v1804
    %v1821 = vmul.f32 %v1805, %v1805
    %v1822 = vmul.f32 %v1806, %v1806
    %v1823 = vsub.f32 %v1807, %v1815
    %v1824 = vsub.f32 %v1808, %v1816
    %v1825 = vsub.f32 %v1809, %v1817
    %v1826 = vsub.f32 %v1810, %v1818
    %v1827 = vsub.f32 %v1811, %v1819
    %v1828 = vsub.f32 %v1812, %v1820
    %v1829 = vsub.f32 %v1813, %v1821
    %v1830 = vsub.f32 %v1814, %v1822
    %v1831 = vmax.f32 %v1823, 0.0
    %v1832 = vmax.f32 %v1824, 0.0
    %v1833 = vmax.f32 %v1825, 0.0
    %v1834 = vmax.f32 %v1826, 0.0
    %v1835 = vmax.f32 %v1827, 0.0
    %v1836 = vmax.f32 %v1828, 0.0
    %v1837 = vmax.f32 %v1829, 0.0
    %v1838 = vmax.f32 %v1830, 0.0
    %v1839 = vmul.f32 %v1632, %v1799
    %v1840 = vmul.f32 %v1633, %v1800
    %v1841 = vmul.f32 %v1634, %v1801
    %v1842 = vmul.f32 %v1635, %v1802
    %v1843 = vmul.f32 %v1636, %v1803
    %v1844 = vmul.f32 %v1637, %v1804
    %v1845 = vmul.f32 %v1638, %v1805
    %v1846 = vmul.f32 %v1639, %v1806
    %v1847 = vsel %vm1741, %v1839, 0.0
    %v1848 = vsel %vm1741, %v1840, 0.0
    %v1849 = vadd.f32 %v1847, %v1848
    %v1850 = vsel %vm1741, %v1841, 0.0
    %v1851 = vadd.f32 %v1849, %v1850
    %v1852 = vsel %vm1741, %v1842, 0.0
    %v1853 = vadd.f32 %v1851, %v1852
    %v1854 = vsel %vm1741, %v1843, 0.0
    %v1855 = vadd.f32 %v1853, %v1854
    %v1856 = vsel %vm1741, %v1844, 0.0
    %v1857 = vadd.f32 %v1855, %v1856
    %v1858 = vsel %vm1741, %v1845, 0.0
    %v1859 = vadd.f32 %v1857, %v1858
    %v1860 = vsel %vm1741, %v1846, 0.0
    %v1861 = vadd.f32 %v1859, %v1860
    %v1862 = vrot.slane %v1861, 4
    %v1863 = vadd.f32 %v1861, %v1862
    %v1864 = vrot.slane %v1863, 2
    %v1865 = vadd.f32 %v1863, %v1864
    %v1866 = vrot.slane %v1865, 1
    %v1867 = vadd.f32 %v1865, %v1866
    %v1868 = vmul.f32 %v1632, %v1831
    %v1869 = vmul.f32 %v1633, %v1832
    %v1870 = vmul.f32 %v1634, %v1833
    %v1871 = vmul.f32 %v1635, %v1834
    %v1872 = vmul.f32 %v1636, %v1835
    %v1873 = vmul.f32 %v1637, %v1836
    %v1874 = vmul.f32 %v1638, %v1837
    %v1875 = vmul.f32 %v1639, %v1838
    %v1876 = vsel %vm1741, %v1868, 0.0
    %v1877 = vsel %vm1741, %v1869, 0.0
    %v1878 = vadd.f32 %v1876, %v1877
    %v1879 = vsel %vm1741, %v1870, 0.0
    %v1880 = vadd.f32 %v1878, %v1879
    %v1881 = vsel %vm1741, %v1871, 0.0
    %v1882 = vadd.f32 %v1880, %v1881
    %v1883 = vsel %vm1741, %v1872, 0.0
    %v1884 = vadd.f32 %v1882, %v1883
    %v1885 = vsel %vm1741, %v1873, 0.0
    %v1886 = vadd.f32 %v1884, %v1885
    %v1887 = vsel %vm1741, %v1874, 0.0
    %v1888 = vadd.f32 %v1886, %v1887
    %v1889 = vsel %vm1741, %v1875, 0.0
    %v1890 = vadd.f32 %v1888, %v1889
    %v1891 = vrot.slane %v1890, 4
    %v1892 = vadd.f32 %v1890, %v1891
    %v1893 = vrot.slane %v1892, 2
    %v1894 = vadd.f32 %v1892, %v1893
    %v1895 = vrot.slane %v1894, 1
    %v1896 = vadd.f32 %v1894, %v1895
    %v1897 = vadd.f32 %v1896, 1e-05
    %v1898 = vrsqrt.pop %v1897
    %v1899 = vsub.f32 %v1716, %v1867
    %v1900 = vmul.f32 %v1640, %v1898
    %v1901 = vlaneseq
    %v1902 = vshrl.u32 %v1901, 7
    %v1903 = vsub.s32 0, %v1902
    %v1904 = vrot.slane %v1900, %v1903
    %v1905 = vmul.f32 %v1899, %v1904
    %v1906 = vlaneseq
    %v1907 = vshrl.u32 %v1906, 7
    %v1908 = vsub.s32 0, %v1907
    %v1909 = vrot.slane %v1641, %v1908
    %v1910 = vadd.f32 %v1905, %v1909
    %v1911 = vld [vmem:[%s9] sm:$0xff]
    %v1912 = vld [vmem:[%s9 + $0x8] sm:$0xff]
    %v1913 = vld [vmem:[%s9 + $0x10] sm:$0xff]
    %v1914 = vld [vmem:[%s9 + $0x18] sm:$0xff]
    %v1915 = vld [vmem:[%s9 + $0x20] sm:$0xff]
    %v1916 = vld [vmem:[%s9 + $0x28] sm:$0xff]
    %v1917 = vld [vmem:[%s9 + $0x30] sm:$0xff]
    %v1918 = vld [vmem:[%s9 + $0x38] sm:$0xff]
    %v1919 = vld [vmem:[%s9 + $0x40] sm:$0x1]
    %v1920 = vlaneseq
    %v1921 = vshrl.u32 %v1920, 7
    %v1922 = vsub.s32 0, %v1921
    %v1923 = vrot.slane %v1919, %v1922
    %v1925 = vsel %vm1741, %v1910, 0
    %1927 = vmatprep.subr.mxu0 0.0
    %1928 = vmatpush1.msra.mxu0 %v1911
    %1929 = vmatprep.subr.mxu0 0.0
    %1930 = vmatpush1.msra.mxu0 %v1912
    %1931 = vmatprep.subr.mxu0 0.0
    %1932 = vmatpush1.msra.mxu0 %v1913
    %1933 = vmatprep.subr.mxu0 0.0
    %1934 = vmatpush1.msra.mxu0 %v1914
    %1935 = vmatprep.subr.mxu0 0.0
    %1936 = vmatpush1.msra.mxu0 %v1915
    %1937 = vmatprep.subr.mxu0 0.0
    %1938 = vmatpush1.msra.mxu0 %v1916
    %1939 = vmatprep.subr.mxu0 0.0
    %1940 = vmatpush1.msra.mxu0 %v1917
    %1941 = vmatprep.subr.mxu0 0.0
    %1942 = vmatpush1.msra.mxu0 %v1918
    %1943 = vmatprep.subr.mxu0 0.0
    %1944 = vmatpush1.msra.mxu0 0.0
    %1945 = vmatprep.subr.mxu0 0.0
    %1946 = vmatpush1.msra.mxu0 0.0
    %1947 = vmatprep.subr.mxu0 0.0
    %1948 = vmatpush1.msra.mxu0 0.0
    %1949 = vmatprep.subr.mxu0 0.0
    %1950 = vmatpush1.msra.mxu0 0.0
    %1951 = vmatprep.subr.mxu0 0.0
    %1952 = vmatpush1.msra.mxu0 0.0
    %1953 = vmatprep.subr.mxu0 0.0
    %1954 = vmatpush1.msra.mxu0 0.0
    %1955 = vmatprep.subr.mxu0 0.0
    %1956 = vmatpush1.msra.mxu0 0.0
    %1957 = vmatprep.subr.mxu0 0.0
    %1958 = vmatpush1.msra.mxu0 0.0
    %1959 = vmatprep.subr.mxu0 0.0
    %1960 = vmatpush1.msra.mxu0 0.0
    %1961 = vmatprep.subr.mxu0 0.0
    %1962 = vmatpush1.msra.mxu0 0.0
    %1963 = vmatprep.subr.mxu0 0.0
    %1964 = vmatpush1.msra.mxu0 0.0
    %1965 = vmatprep.subr.mxu0 0.0
    %1966 = vmatpush1.msra.mxu0 0.0
    %1967 = vmatprep.subr.mxu0 0.0
    %1968 = vmatpush1.msra.mxu0 0.0
    %1969 = vmatprep.subr.mxu0 0.0
    %1970 = vmatpush1.msra.mxu0 0.0
    %1971 = vmatprep.subr.mxu0 0.0
    %1972 = vmatpush1.msra.mxu0 0.0
    %1973 = vmatprep.subr.mxu0 0.0
    %1974 = vmatpush1.msra.mxu0 0.0
    %1975 = vmatprep.subr.mxu0 0.0
    %1976 = vmatpush1.msra.mxu0 0.0
    %1977 = vmatprep.subr.mxu0 0.0
    %1978 = vmatpush1.msra.mxu0 0.0
    %1979 = vmatprep.subr.mxu0 0.0
    %1980 = vmatpush1.msra.mxu0 0.0
    %1981 = vmatprep.subr.mxu0 0.0
    %1982 = vmatpush1.msra.mxu0 0.0
    %1983 = vmatprep.subr.mxu0 0.0
    %1984 = vmatpush1.msra.mxu0 0.0
    %1985 = vmatprep.subr.mxu0 0.0
    %1986 = vmatpush1.msra.mxu0 0.0
    %1987 = vmatprep.subr.mxu0 0.0
    %1988 = vmatpush1.msra.mxu0 0.0
    %1989 = vmatprep.subr.mxu0 0.0
    %1990 = vmatpush1.msra.mxu0 0.0
    %1991 = vmatprep.mubr.f32.mxu0 0.0
    %1992 = vmatmul.mubr.f32.gmra.mrb[0].mxu0 %v1925
    %v1993 = vpop.f32.mrb[0].mxu0
    %v1994 = vadd.f32 %v1923, %v1993
    %v1995 = vpop.f32.mrb[0].mxu0
    %1996 = vdwg.mxu0
    %vm1997 = vcmask 74752
    %1998 = vst.msk [vmem:[#allocation14] sm:$0x3] %vm1997, %v1994
    // Predicated region
    $region70: #{tpu_custom_call.1} parent=1 // pred_check
      _
    $region71: #{tpu_custom_call.1} parent=1 // pred_check_branch
      %2000 = sbr.rel (0) target = $region73
    $region72: #{tpu_custom_call.1} parent=1 // pred_region
      %s2002 = ssub.s32 32, 32
      %2003 = vsyncadd [#allocation4], %s2002
      %s2005 = sshll.u32 [#allocation14], 4
      %s2006 = int_to_ptr.vmem [resolvable:$true] %s2005
      %2008 = dma.vmem_to_hbm [thread:$0]  %s2006, 32, %s10, [#allocation4]
    $region73: #{tpu_custom_call.1} parent=1 // pred_fallthru
      _
    // Predicated region
    $region74: #{tpu_custom_call.1} parent=1 // pred_check
      _
    $region75: #{tpu_custom_call.1} parent=1 // pred_check_branch
      %2010 = sbr.rel (0) target = $region77
    $region76: #{tpu_custom_call.1} parent=1 // pred_region
      %2011 = dma.done [#allocation4], 32
    $region77: #{tpu_custom_call.1} parent=1 // pred_fallthru
      _
    %2012 = vsyncpa [#allocation3], 1
    %2013 = vsyncpa [#allocation6], 1
    %2014 = vsyncpa [#allocation9], 1
    %2015 = vsyncpa [#allocation12], 1
    %2016 = vsyncpa [#allocation4], 1

</llo_original>
